<compile_context>
chip_gen: v7x
topology: tpu7x:2x2x1
jax: 0.10.0
libtpu: 0.0.40
codegen_flags: <defaults>
</compile_context>

<pallas_src>
import functools

import jax
import jax.numpy as jnp
from jax.experimental import pallas as pl
from jax.experimental.pallas import tpu as pltpu


_VMEM_LIMIT = 64 * 1024 * 1024


# ----------------------------- kernel helpers ------------------------------

def _layer_norm(x, gamma, beta, eps=1e-5):
    # PyTorch nn.LayerNorm over the last dim (biased variance, eps=1e-5).
    mean = jnp.mean(x, axis=-1, keepdims=True)
    var = jnp.mean((x - mean) ** 2, axis=-1, keepdims=True)
    return (x - mean) * jax.lax.rsqrt(var + eps) * gamma + beta


# ------------------------ encoder block Pallas kernel -----------------------

def encoder_block_kernel(num_heads,
                         x_ref,                    # (bt*S, H) f32 activations
                         mask_ref,                 # (bt, 1, S) int32 key mask
                         wqkv_ref, bqkv_ref,       # (H, 3H) bf16, (1, 3H) f32
                         wo_ref, bo_ref,           # (H, H) bf16, (1, H) f32
                         g1_ref, be1_ref,          # LayerNorm 1 (f32)
                         w1_ref, b1_ref,           # (H, F) bf16, (1, F) f32
                         w2_ref, b2_ref,           # (F, H) bf16, (1, H) f32
                         g2_ref, be2_ref,          # LayerNorm 2 (f32)
                         out_ref):                 # (bt*S, H) f32
    M, H = x_ref.shape
    bt, _, S = mask_ref.shape
    dh = H // num_heads

    x = x_ref[...]                                 # (M, H) f32
    xb = x.astype(jnp.bfloat16)

    # Fused Q/K/V projection: one big MXU matmul, M = bt*S, N = 3H.
    # (1/sqrt(dh) scale already folded into the q columns of wqkv/bqkv.)
    qkv = jnp.dot(xb, wqkv_ref[...],
                  preferred_element_type=jnp.float32) + bqkv_ref[...]

    keep = mask_ref[...] != 0                      # (bt, 1, S) bool

    # Per-head attention, batched over the bt sequences in this block.
    # No concatenate: each head's context is accumulated through its
    # wo[h*dh:(h+1)*dh, :] slice into a single (M, H) accumulator.
    acc = jnp.zeros((M, H), jnp.float32)
    for h in range(num_heads):                     # static unroll (small)
        qh = qkv[:, h * dh:(h + 1) * dh].reshape(bt, S, dh).astype(jnp.bfloat16)
        kh = qkv[:, H + h * dh:H + (h + 1) * dh].reshape(bt, S, dh).astype(jnp.bfloat16)
        vh = qkv[:, 2 * H + h * dh:2 * H + (h + 1) * dh].reshape(bt, S, dh).astype(jnp.bfloat16)

        s = jnp.einsum('bqd,bkd->bqk', qh, kh,
                       preferred_element_type=jnp.float32)       # (bt, S, S)
        s = jnp.where(keep, s, jnp.float32(-1e6))                 # d2l masked_softmax
        m = jnp.max(s, axis=-1, keepdims=True)
        e = jnp.exp(s - m)
        denom = jnp.sum(e, axis=-1, keepdims=True)
        p = e * pl.reciprocal(denom, approx=True)                 # EUP reciprocal

        ctx = jnp.einsum('bqk,bkd->bqd', p.astype(jnp.bfloat16), vh,
                         preferred_element_type=jnp.float32)      # (bt, S, dh)
        acc = acc + jnp.dot(ctx.reshape(M, dh).astype(jnp.bfloat16),
                            wo_ref[h * dh:(h + 1) * dh, :],
                            preferred_element_type=jnp.float32)

    attn_out = acc + bo_ref[...]

    # AddNorm 1 (f32)
    y = _layer_norm(x + attn_out, g1_ref[...], be1_ref[...])

    # PositionWiseFFN: two big 2-D MXU matmuls over M = bt*S rows.
    hmid = jnp.dot(y.astype(jnp.bfloat16), w1_ref[...],
                   preferred_element_type=jnp.float32) + b1_ref[...]
    hmid = jnp.maximum(hmid, 0.0)
    ffn = jnp.dot(hmid.astype(jnp.bfloat16), w2_ref[...],
                  preferred_element_type=jnp.float32) + b2_ref[...]

    # AddNorm 2 (f32)
    out_ref[...] = _layer_norm(y + ffn, g2_ref[...], be2_ref[...])


def _choose_bt(B, S, target_rows=256):
    """Smallest divisor of B giving >= target_rows rows per block (else B)."""
    for cand in range(1, B + 1):
        if B % cand == 0 and cand * S >= target_rows:
            return cand
    return B


def encoder_block(x2d, mask, p, num_heads, bt):
    """One d2l.EncoderBlock (use_bias=True) on flattened activations (B*S, H)."""
    M, H = x2d.shape
    B = mask.shape[0]
    S = M // B
    rows = bt * S
    grid = (B // bt,)

    def full(arr):
        # Grid-invariant (weights / biases / LN params): whole array each step.
        # TODO(synk): pipeline_mode=pl.Buffered(1) to single-buffer these once
        # verified on the target jax version (halves resident weight VMEM).
        return pl.BlockSpec(arr.shape, lambda i: (0,) * arr.ndim)

    in_specs = [
        pl.BlockSpec((rows, H), lambda i: (i, 0)),
        pl.BlockSpec((bt, 1, S), lambda i: (i, 0, 0)),
        full(p["wqkv"]), full(p["bqkv"]),
        full(p["wo"]), full(p["bo"]),
        full(p["g1"]), full(p["be1"]),
        full(p["w1"]), full(p["b1"]),
        full(p["w2"]), full(p["b2"]),
        full(p["g2"]), full(p["be2"]),
    ]

    return pl.pallas_call(
        functools.partial(encoder_block_kernel, num_heads),
        out_shape=jax.ShapeDtypeStruct((M, H), jnp.float32),
        grid_spec=pltpu.PrefetchScalarGridSpec(
            num_scalar_prefetch=0,
            grid=grid,
            in_specs=in_specs,
            out_specs=pl.BlockSpec((rows, H), lambda i: (i, 0)),
        ),
        compiler_params=pltpu.CompilerParams(
            dimension_semantics=("parallel",),
            vmem_limit_bytes=_VMEM_LIMIT),
    )(x2d, mask, p["wqkv"], p["bqkv"], p["wo"], p["bo"], p["g1"], p["be1"],
      p["w1"], p["b1"], p["w2"], p["b2"], p["g2"], p["be2"])


# --------------------------- MaskLM MLP Pallas kernel ------------------------

def mlm_kernel(x_ref, w1_ref, b1_ref, g_ref, be_ref, w2_ref, b2_ref, out_ref):
    x = x_ref[...].astype(jnp.bfloat16)            # (M, H), M = B*P
    h = jnp.dot(x, w1_ref[...],
                preferred_element_type=jnp.float32) + b1_ref[...]
    h = jnp.maximum(h, 0.0)
    h = _layer_norm(h, g_ref[...], be_ref[...])
    out_ref[...] = jnp.dot(h.astype(jnp.bfloat16), w2_ref[...],
                           preferred_element_type=jnp.float32) + b2_ref[...]


def mlm_head(masked_x2d, p):
    """Linear -> ReLU -> LayerNorm -> Linear on flattened (B*P, H) positions.

    Output projection tiled over the (128-padded) vocab dimension so a real
    vocab-size weight never has to sit fully in VMEM; output tiles are
    lane-dense multiples of 128.
    """
    M, H = masked_x2d.shape
    Hm = p["w1"].shape[1]
    Vp = p["w2p"].shape[1]

    tile_v = Vp
    for cand in (2048, 1024, 512, 256, 128):
        if Vp % cand == 0:
            tile_v = cand
            break
    grid = (Vp // tile_v,)

    def full(arr):
        return pl.BlockSpec(arr.shape, lambda j: (0,) * arr.ndim)

    return pl.pallas_call(
        mlm_kernel,
        out_shape=jax.ShapeDtypeStruct((M, Vp), jnp.float32),
        grid_spec=pltpu.PrefetchScalarGridSpec(
            num_scalar_prefetch=0,
            grid=grid,
            in_specs=[
                pl.BlockSpec((M, H), lambda j: (0, 0)),
                full(p["w1"]), full(p["b1"]), full(p["g"]), full(p["be"]),
                pl.BlockSpec((Hm, tile_v), lambda j: (0, j)),
                pl.BlockSpec((1, tile_v), lambda j: (0, j)),
            ],
            out_specs=pl.BlockSpec((M, tile_v), lambda j: (0, j)),
        ),
        compiler_params=pltpu.CompilerParams(
            dimension_semantics=("parallel",),
            vmem_limit_bytes=_VMEM_LIMIT),
    )(masked_x2d, p["w1"], p["b1"], p["g"], p["be"], p["w2p"], p["b2p"])


# ------------------------------ parameter init -------------------------------

def init_params(key, *, vocab_size, num_hiddens, ffn_num_hiddens, num_heads,
                num_layers, max_len):
    H, F, V = num_hiddens, ffn_num_hiddens, vocab_size
    Hm = num_hiddens
    dh = H // num_heads
    Vp = ((V + 127) // 128) * 128
    keys = iter(jax.random.split(key, 8 + 8 * num_layers))

    def nrm(shape, scale=0.02):
        return (scale * jax.random.normal(next(keys), shape)).astype(jnp.float32)

    params = {
        "num_heads": num_heads,
        "vocab_size": V,
        "tok_emb": nrm((V, H)),
        "seg_emb": nrm((2, H)),
        "pos_emb": jax.random.normal(next(keys), (1, max_len, H)).astype(jnp.float32),
        "layers": [],
    }

    scale = 1.0 / jnp.sqrt(jnp.float32(dh))
    for _ in range(num_layers):
        wq, wk, wv, wo = nrm((H, H)), nrm((H, H)), nrm((H, H)), nrm((H, H))
        w1, w2 = nrm((H, F)), nrm((F, H))
        bq = jnp.zeros((1, H), jnp.float32)
        bk = jnp.zeros((1, H), jnp.float32)
        bv = jnp.zeros((1, H), jnp.float32)
        # Fused QKV projection; 1/sqrt(dh) folded into the q columns.
        wqkv = jnp.concatenate([wq * scale, wk, wv], axis=1)
        bqkv = jnp.concatenate([bq * scale, bk, bv], axis=1)
        params["layers"].append({
            "wqkv": wqkv.astype(jnp.bfloat16), "bqkv": bqkv,
            "wo": wo.astype(jnp.bfloat16), "bo": jnp.zeros((1, H), jnp.float32),
            "g1": jnp.ones((1, H), jnp.float32), "be1": jnp.zeros((1, H), jnp.float32),
            "w1": w1.astype(jnp.bfloat16), "b1": jnp.zeros((1, F), jnp.float32),
            "w2": w2.astype(jnp.bfloat16), "b2": jnp.zeros((1, H), jnp.float32),
            "g2": jnp.ones((1, H), jnp.float32), "be2": jnp.zeros((1, H), jnp.float32),
        })

    w2_mlm = nrm((Hm, V))
    w2p = jnp.zeros((Hm, Vp), jnp.float32).at[:, :V].set(w2_mlm)
    params["mlm"] = {
        "w1": nrm((H, Hm)).astype(jnp.bfloat16),
        "b1": jnp.zeros((1, Hm), jnp.float32),
        "g": jnp.ones((1, Hm), jnp.float32),
        "be": jnp.zeros((1, Hm), jnp.float32),
        "w2p": w2p.astype(jnp.bfloat16),
        "b2p": jnp.zeros((1, Vp), jnp.float32),
    }
    return params


# ------------------------------- BERT forward --------------------------------

def bert_forward(params, tokens, segments, valid_lens=None, pred_positions=None):
    B, S = tokens.shape
    H = params["tok_emb"].shape[1]

    # Embedding gathers (glue; no clean in-kernel equivalent without DMA gather).
    X = params["tok_emb"][tokens] + params["seg_emb"][segments]
    X = X + params["pos_emb"][:, :S, :]
    X2d = X.reshape(B * S, H).astype(jnp.float32)

    if valid_lens is None:
        valid_lens = jnp.full((B,), S, dtype=jnp.int32)
    valid_lens = valid_lens.astype(jnp.int32)
    # Key-validity mask (B, 1, S), computed once and shared by every layer.
    mask = (jnp.arange(S, dtype=jnp.int32)[None, None, :]
            < valid_lens[:, None, None]).astype(jnp.int32)

    bt = _choose_bt(B, S)
    # TODO(synk): fuse all encoder layers into one pallas_call (layer index as
    # an 'arbitrary' grid axis, weights streamed per step) so X stays in VMEM.
    for layer_p in params["layers"]:
        X2d = encoder_block(X2d, mask, layer_p, params["num_heads"], bt)

    encoded_X = X2d.reshape(B, S, H)

    mlm_Y_hat = None
    if pred_positions is not None:
        P = pred_positions.shape[1]
        # masked_X = X[batch_idx, pred_positions]  (glue gather)
        masked_X = jnp.take_along_axis(encoded_X, pred_positions[..., None], axis=1)
        logits_p = mlm_head(masked_X.reshape(B * P, H), params["mlm"])
        V = params["vocab_size"]
        mlm_Y_hat = logits_p[:, :V].reshape(B, P, V)

    return encoded_X, mlm_Y_hat


# ------------------------------------ main ------------------------------------

if __name__ == "__main__":
    # Small config consistent with the module's constructor.
    VOCAB = 100
    H = 32          # num_hiddens = key/query/value_size = ffn_num_input = mlm_in_features
    FFN = 64        # ffn_num_hiddens
    HEADS = 2
    LAYERS = 2
    MAXLEN = 64
    B, S, P = 2, 8, 3

    key = jax.random.PRNGKey(0)
    k_param, k_tok, k_seg, k_pred = jax.random.split(key, 4)

    params = init_params(k_param, vocab_size=VOCAB, num_hiddens=H,
                         ffn_num_hiddens=FFN, num_heads=HEADS,
                         num_layers=LAYERS, max_len=MAXLEN)

    tokens = jax.random.randint(k_tok, (B, S), 0, VOCAB, dtype=jnp.int32)
    segments = jax.random.randint(k_seg, (B, S), 0, 2, dtype=jnp.int32)
    valid_lens = jnp.array([S, 5], dtype=jnp.int32)
    pred_positions = jax.random.randint(k_pred, (B, P), 0, S, dtype=jnp.int32)

    encoded_X, mlm_Y_hat = bert_forward(params, tokens, segments,
                                        valid_lens, pred_positions)
    jax.block_until_ready(encoded_X)
    jax.block_until_ready(mlm_Y_hat)

    assert encoded_X.shape == (B, S, H)
    assert mlm_Y_hat.shape == (B, P, VOCAB)
    assert bool(jnp.all(jnp.isfinite(encoded_X))) and bool(jnp.all(jnp.isfinite(mlm_Y_hat)))

    print("KERNEL_OK")
</pallas_src>

<mosaic_0001>
module attributes {stable_mosaic.version = 11 : i64} {
  func.func @encoder_block_kernel(%arg0: i32, %arg1: memref<16x32xf32, #tpu.memory_space<vmem>>, %arg2: memref<2x1x8xi32, #tpu.memory_space<vmem>>, %arg3: memref<32x96xbf16, #tpu.memory_space<vmem>>, %arg4: memref<1x96xf32, #tpu.memory_space<vmem>>, %arg5: memref<32x32xbf16, #tpu.memory_space<vmem>>, %arg6: memref<1x32xf32, #tpu.memory_space<vmem>>, %arg7: memref<1x32xf32, #tpu.memory_space<vmem>>, %arg8: memref<1x32xf32, #tpu.memory_space<vmem>>, %arg9: memref<32x64xbf16, #tpu.memory_space<vmem>>, %arg10: memref<1x64xf32, #tpu.memory_space<vmem>>, %arg11: memref<64x32xbf16, #tpu.memory_space<vmem>>, %arg12: memref<1x32xf32, #tpu.memory_space<vmem>>, %arg13: memref<1x32xf32, #tpu.memory_space<vmem>>, %arg14: memref<1x32xf32, #tpu.memory_space<vmem>>, %arg15: memref<16x32xf32, #tpu.memory_space<vmem>>) attributes {dimension_semantics = [#tpu.dimension_semantics<parallel>], iteration_bounds = array<i64: 1>, scalar_prefetch = 0 : i64, scratch_operands = 0 : i64, tpu.core_type = #tpu.core_type<tc>, window_params = [{transform_indices = @transform_0, window_bounds = array<i64: 16, 32>}, {transform_indices = @transform_1, window_bounds = array<i64: 2, 1, 8>}, {pipeline_mode = #tpu.pipeline_mode<synchronous>, transform_indices = @transform_2, window_bounds = array<i64: 32, 96>}, {pipeline_mode = #tpu.pipeline_mode<synchronous>, transform_indices = @transform_3, window_bounds = array<i64: 1, 96>}, {pipeline_mode = #tpu.pipeline_mode<synchronous>, transform_indices = @transform_4, window_bounds = array<i64: 32, 32>}, {pipeline_mode = #tpu.pipeline_mode<synchronous>, transform_indices = @transform_5, window_bounds = array<i64: 1, 32>}, {pipeline_mode = #tpu.pipeline_mode<synchronous>, transform_indices = @transform_6, window_bounds = array<i64: 1, 32>}, {pipeline_mode = #tpu.pipeline_mode<synchronous>, transform_indices = @transform_7, window_bounds = array<i64: 1, 32>}, {pipeline_mode = #tpu.pipeline_mode<synchronous>, transform_indices = @transform_8, window_bounds = array<i64: 32, 64>}, {pipeline_mode = #tpu.pipeline_mode<synchronous>, transform_indices = @transform_9, window_bounds = array<i64: 1, 64>}, {pipeline_mode = #tpu.pipeline_mode<synchronous>, transform_indices = @transform_10, window_bounds = array<i64: 64, 32>}, {pipeline_mode = #tpu.pipeline_mode<synchronous>, transform_indices = @transform_11, window_bounds = array<i64: 1, 32>}, {pipeline_mode = #tpu.pipeline_mode<synchronous>, transform_indices = @transform_12, window_bounds = array<i64: 1, 32>}, {pipeline_mode = #tpu.pipeline_mode<synchronous>, transform_indices = @transform_13, window_bounds = array<i64: 1, 32>}, {transform_indices = @transform_14, window_bounds = array<i64: 16, 32>}]} {
    %c0 = arith.constant 0 : index
    %c0_0 = arith.constant 0 : index
    %0 = vector.load %arg1[%c0, %c0_0] : memref<16x32xf32, #tpu.memory_space<vmem>>, vector<16x32xf32>
    %1 = arith.truncf %0 : vector<16x32xf32> to vector<16x32xbf16>
    %c0_1 = arith.constant 0 : index
    %c0_2 = arith.constant 0 : index
    %2 = vector.load %arg3[%c0_1, %c0_2] : memref<32x96xbf16, #tpu.memory_space<vmem>>, vector<32x96xbf16>
    %cst = arith.constant dense<0.000000e+00> : vector<16x96xf32>
    %3 = tpu.matmul %1, %2, %cst {dimension_numbers = #tpu.dot_dimension_numbers<[1], [0], [0], [1], [0, 0, 1, 1], [], []>} : vector<16x32xbf16>, vector<32x96xbf16>, vector<16x96xf32> -> vector<16x96xf32>
    %c0_3 = arith.constant 0 : index
    %c0_4 = arith.constant 0 : index
    %4 = vector.load %arg4[%c0_3, %c0_4] : memref<1x96xf32, #tpu.memory_space<vmem>>, vector<1x96xf32>
    %5 = vector.broadcast %4 : vector<1x96xf32> to vector<16x96xf32>
    %6 = arith.addf %3, %5 : vector<16x96xf32>
    %c0_5 = arith.constant 0 : index
    %c0_6 = arith.constant 0 : index
    %c0_7 = arith.constant 0 : index
    %7 = vector.load %arg2[%c0_5, %c0_6, %c0_7] : memref<2x1x8xi32, #tpu.memory_space<vmem>>, vector<2x1x8xi32>
    %c0_i32 = arith.constant 0 : i32
    %8 = vector.broadcast %c0_i32 : i32 to vector<2x1x8xi32>
    %9 = arith.cmpi ne, %7, %8 : vector<2x1x8xi32>
    %cst_8 = arith.constant 0.000000e+00 : f32
    %10 = vector.broadcast %cst_8 : f32 to vector<16x32xf32>
    %11 = vector.extract_strided_slice %6 {offsets = [0, 0], sizes = [16, 16], strides = [1, 1]} : vector<16x96xf32> to vector<16x16xf32>
    %12 = vector.shape_cast %11 : vector<16x16xf32> to vector<2x8x16xf32>
    %13 = arith.truncf %12 : vector<2x8x16xf32> to vector<2x8x16xbf16>
    %14 = vector.extract_strided_slice %6 {offsets = [0, 32], sizes = [16, 16], strides = [1, 1]} : vector<16x96xf32> to vector<16x16xf32>
    %15 = vector.shape_cast %14 : vector<16x16xf32> to vector<2x8x16xf32>
    %16 = arith.truncf %15 : vector<2x8x16xf32> to vector<2x8x16xbf16>
    %17 = vector.extract_strided_slice %6 {offsets = [0, 64], sizes = [16, 16], strides = [1, 1]} : vector<16x96xf32> to vector<16x16xf32>
    %18 = vector.shape_cast %17 : vector<16x16xf32> to vector<2x8x16xf32>
    %19 = arith.truncf %18 : vector<2x8x16xf32> to vector<2x8x16xbf16>
    "tpu.trace_start"() <{level = 10 : i32, message = "bqd,bkd->bqk"}> : () -> ()
    %cst_9 = arith.constant dense<0.000000e+00> : vector<2x8x8xf32>
    %20 = tpu.matmul %13, %16, %cst_9 {dimension_numbers = #tpu.dot_dimension_numbers<[2], [2], [1], [1], [0, 0, 0, 1, 1, 1], [0], [0]>} : vector<2x8x16xbf16>, vector<2x8x16xbf16>, vector<2x8x8xf32> -> vector<2x8x8xf32>
    %cst_10 = arith.constant -1.000000e+06 : f32
    "tpu.trace_stop"() : () -> ()
    %21 = vector.shape_cast %9 : vector<2x1x8xi1> to vector<2x1x8xi1>
    %22 = vector.broadcast %21 : vector<2x1x8xi1> to vector<2x8x8xi1>
    %23 = vector.broadcast %cst_10 : f32 to vector<2x8x8xf32>
    %24 = arith.select %22, %20, %23 : vector<2x8x8xi1>, vector<2x8x8xf32>
    %cst_11 = arith.constant dense<0xFF800000> : vector<2x8xf32>
    %25 = vector.multi_reduction <maximumf>, %24, %cst_11 [2] : vector<2x8x8xf32> to vector<2x8xf32>
    %26 = vector.shape_cast %25 : vector<2x8xf32> to vector<2x8x1xf32>
    %27 = vector.broadcast %26 : vector<2x8x1xf32> to vector<2x8x8xf32>
    %28 = arith.subf %24, %27 : vector<2x8x8xf32>
    %29 = math.exp %28 : vector<2x8x8xf32>
    %cst_12 = arith.constant dense<0.000000e+00> : vector<2x8xf32>
    %30 = vector.multi_reduction <add>, %29, %cst_12 [2] : vector<2x8x8xf32> to vector<2x8xf32>
    %31 = vector.shape_cast %30 : vector<2x8xf32> to vector<2x8x1xf32>
    %32 = tpu.reciprocal %31 {approx = true} : vector<2x8x1xf32> -> vector<2x8x1xf32>
    %33 = vector.broadcast %32 : vector<2x8x1xf32> to vector<2x8x8xf32>
    %34 = arith.mulf %29, %33 : vector<2x8x8xf32>
    %35 = arith.truncf %34 : vector<2x8x8xf32> to vector<2x8x8xbf16>
    "tpu.trace_start"() <{level = 10 : i32, message = "bqk,bkd->bqd"}> : () -> ()
    %cst_13 = arith.constant dense<0.000000e+00> : vector<2x8x16xf32>
    %36 = tpu.matmul %35, %19, %cst_13 {dimension_numbers = #tpu.dot_dimension_numbers<[2], [1], [1], [2], [0, 0, 0, 1, 1, 2], [0], [0]>} : vector<2x8x8xbf16>, vector<2x8x16xbf16>, vector<2x8x16xf32> -> vector<2x8x16xf32>
    "tpu.trace_stop"() : () -> ()
    %37 = vector.shape_cast %36 : vector<2x8x16xf32> to vector<16x16xf32>
    %38 = arith.truncf %37 : vector<16x16xf32> to vector<16x16xbf16>
    %c0_14 = arith.constant 0 : index
    %c0_15 = arith.constant 0 : index
    %39 = vector.load %arg5[%c0_14, %c0_15] : memref<32x32xbf16, #tpu.memory_space<vmem>>, vector<16x32xbf16>
    %cst_16 = arith.constant dense<0.000000e+00> : vector<16x32xf32>
    %40 = tpu.matmul %38, %39, %cst_16 {dimension_numbers = #tpu.dot_dimension_numbers<[1], [0], [0], [1], [0, 0, 1, 1], [], []>} : vector<16x16xbf16>, vector<16x32xbf16>, vector<16x32xf32> -> vector<16x32xf32>
    %41 = arith.addf %10, %40 : vector<16x32xf32>
    %42 = vector.extract_strided_slice %6 {offsets = [0, 16], sizes = [16, 16], strides = [1, 1]} : vector<16x96xf32> to vector<16x16xf32>
    %43 = vector.shape_cast %42 : vector<16x16xf32> to vector<2x8x16xf32>
    %44 = arith.truncf %43 : vector<2x8x16xf32> to vector<2x8x16xbf16>
    %45 = vector.extract_strided_slice %6 {offsets = [0, 48], sizes = [16, 16], strides = [1, 1]} : vector<16x96xf32> to vector<16x16xf32>
    %46 = vector.shape_cast %45 : vector<16x16xf32> to vector<2x8x16xf32>
    %47 = arith.truncf %46 : vector<2x8x16xf32> to vector<2x8x16xbf16>
    %48 = vector.extract_strided_slice %6 {offsets = [0, 80], sizes = [16, 16], strides = [1, 1]} : vector<16x96xf32> to vector<16x16xf32>
    %49 = vector.shape_cast %48 : vector<16x16xf32> to vector<2x8x16xf32>
    %50 = arith.truncf %49 : vector<2x8x16xf32> to vector<2x8x16xbf16>
    "tpu.trace_start"() <{level = 10 : i32, message = "bqd,bkd->bqk"}> : () -> ()
    %cst_17 = arith.constant dense<0.000000e+00> : vector<2x8x8xf32>
    %51 = tpu.matmul %44, %47, %cst_17 {dimension_numbers = #tpu.dot_dimension_numbers<[2], [2], [1], [1], [0, 0, 0, 1, 1, 1], [0], [0]>} : vector<2x8x16xbf16>, vector<2x8x16xbf16>, vector<2x8x8xf32> -> vector<2x8x8xf32>
    %cst_18 = arith.constant -1.000000e+06 : f32
    "tpu.trace_stop"() : () -> ()
    %52 = vector.shape_cast %9 : vector<2x1x8xi1> to vector<2x1x8xi1>
    %53 = vector.broadcast %52 : vector<2x1x8xi1> to vector<2x8x8xi1>
    %54 = vector.broadcast %cst_18 : f32 to vector<2x8x8xf32>
    %55 = arith.select %53, %51, %54 : vector<2x8x8xi1>, vector<2x8x8xf32>
    %cst_19 = arith.constant dense<0xFF800000> : vector<2x8xf32>
    %56 = vector.multi_reduction <maximumf>, %55, %cst_19 [2] : vector<2x8x8xf32> to vector<2x8xf32>
    %57 = vector.shape_cast %56 : vector<2x8xf32> to vector<2x8x1xf32>
    %58 = vector.broadcast %57 : vector<2x8x1xf32> to vector<2x8x8xf32>
    %59 = arith.subf %55, %58 : vector<2x8x8xf32>
    %60 = math.exp %59 : vector<2x8x8xf32>
    %cst_20 = arith.constant dense<0.000000e+00> : vector<2x8xf32>
    %61 = vector.multi_reduction <add>, %60, %cst_20 [2] : vector<2x8x8xf32> to vector<2x8xf32>
    %62 = vector.shape_cast %61 : vector<2x8xf32> to vector<2x8x1xf32>
    %63 = tpu.reciprocal %62 {approx = true} : vector<2x8x1xf32> -> vector<2x8x1xf32>
    %64 = vector.broadcast %63 : vector<2x8x1xf32> to vector<2x8x8xf32>
    %65 = arith.mulf %60, %64 : vector<2x8x8xf32>
    %66 = arith.truncf %65 : vector<2x8x8xf32> to vector<2x8x8xbf16>
    "tpu.trace_start"() <{level = 10 : i32, message = "bqk,bkd->bqd"}> : () -> ()
    %cst_21 = arith.constant dense<0.000000e+00> : vector<2x8x16xf32>
    %67 = tpu.matmul %66, %50, %cst_21 {dimension_numbers = #tpu.dot_dimension_numbers<[2], [1], [1], [2], [0, 0, 0, 1, 1, 2], [0], [0]>} : vector<2x8x8xbf16>, vector<2x8x16xbf16>, vector<2x8x16xf32> -> vector<2x8x16xf32>
    "tpu.trace_stop"() : () -> ()
    %68 = vector.shape_cast %67 : vector<2x8x16xf32> to vector<16x16xf32>
    %69 = arith.truncf %68 : vector<16x16xf32> to vector<16x16xbf16>
    %c16 = arith.constant 16 : index
    %c0_22 = arith.constant 0 : index
    %70 = vector.load %arg5[%c16, %c0_22] : memref<32x32xbf16, #tpu.memory_space<vmem>>, vector<16x32xbf16>
    %cst_23 = arith.constant dense<0.000000e+00> : vector<16x32xf32>
    %71 = tpu.matmul %69, %70, %cst_23 {dimension_numbers = #tpu.dot_dimension_numbers<[1], [0], [0], [1], [0, 0, 1, 1], [], []>} : vector<16x16xbf16>, vector<16x32xbf16>, vector<16x32xf32> -> vector<16x32xf32>
    %72 = arith.addf %41, %71 : vector<16x32xf32>
    %c0_24 = arith.constant 0 : index
    %c0_25 = arith.constant 0 : index
    %73 = vector.load %arg6[%c0_24, %c0_25] : memref<1x32xf32, #tpu.memory_space<vmem>>, vector<1x32xf32>
    %74 = vector.broadcast %73 : vector<1x32xf32> to vector<16x32xf32>
    %75 = arith.addf %72, %74 : vector<16x32xf32>
    %76 = arith.addf %0, %75 : vector<16x32xf32>
    %c0_26 = arith.constant 0 : index
    %c0_27 = arith.constant 0 : index
    %77 = vector.load %arg7[%c0_26, %c0_27] : memref<1x32xf32, #tpu.memory_space<vmem>>, vector<1x32xf32>
    %c0_28 = arith.constant 0 : index
    %c0_29 = arith.constant 0 : index
    %78 = vector.load %arg8[%c0_28, %c0_29] : memref<1x32xf32, #tpu.memory_space<vmem>>, vector<1x32xf32>
    %cst_30 = arith.constant dense<0.000000e+00> : vector<16xf32>
    %79 = vector.multi_reduction <add>, %76, %cst_30 [1] : vector<16x32xf32> to vector<16xf32>
    %80 = vector.shape_cast %79 : vector<16xf32> to vector<16x1xf32>
    %cst_31 = arith.constant 3.200000e+01 : f32
    %81 = vector.broadcast %cst_31 : f32 to vector<16x1xf32>
    %82 = arith.divf %80, %81 : vector<16x1xf32>
    %83 = vector.broadcast %82 : vector<16x1xf32> to vector<16x32xf32>
    %84 = arith.subf %76, %83 : vector<16x32xf32>
    %85 = arith.mulf %84, %84 : vector<16x32xf32>
    %cst_32 = arith.constant dense<0.000000e+00> : vector<16xf32>
    %86 = vector.multi_reduction <add>, %85, %cst_32 [1] : vector<16x32xf32> to vector<16xf32>
    %87 = vector.shape_cast %86 : vector<16xf32> to vector<16x1xf32>
    %cst_33 = arith.constant 3.200000e+01 : f32
    %88 = vector.broadcast %cst_33 : f32 to vector<16x1xf32>
    %89 = arith.divf %87, %88 : vector<16x1xf32>
    %90 = vector.broadcast %82 : vector<16x1xf32> to vector<16x32xf32>
    %91 = arith.subf %76, %90 : vector<16x32xf32>
    %cst_34 = arith.constant 9.99999974E-6 : f32
    %92 = vector.broadcast %cst_34 : f32 to vector<16x1xf32>
    %93 = arith.addf %89, %92 : vector<16x1xf32>
    %94 = math.rsqrt %93 : vector<16x1xf32>
    %95 = vector.broadcast %94 : vector<16x1xf32> to vector<16x32xf32>
    %96 = arith.mulf %91, %95 : vector<16x32xf32>
    %97 = vector.broadcast %77 : vector<1x32xf32> to vector<16x32xf32>
    %98 = arith.mulf %96, %97 : vector<16x32xf32>
    %99 = vector.broadcast %78 : vector<1x32xf32> to vector<16x32xf32>
    %100 = arith.addf %98, %99 : vector<16x32xf32>
    %101 = arith.truncf %100 : vector<16x32xf32> to vector<16x32xbf16>
    %c0_35 = arith.constant 0 : index
    %c0_36 = arith.constant 0 : index
    %102 = vector.load %arg9[%c0_35, %c0_36] : memref<32x64xbf16, #tpu.memory_space<vmem>>, vector<32x64xbf16>
    %cst_37 = arith.constant dense<0.000000e+00> : vector<16x64xf32>
    %103 = tpu.matmul %101, %102, %cst_37 {dimension_numbers = #tpu.dot_dimension_numbers<[1], [0], [0], [1], [0, 0, 1, 1], [], []>} : vector<16x32xbf16>, vector<32x64xbf16>, vector<16x64xf32> -> vector<16x64xf32>
    %c0_38 = arith.constant 0 : index
    %c0_39 = arith.constant 0 : index
    %104 = vector.load %arg10[%c0_38, %c0_39] : memref<1x64xf32, #tpu.memory_space<vmem>>, vector<1x64xf32>
    %105 = vector.broadcast %104 : vector<1x64xf32> to vector<16x64xf32>
    %106 = arith.addf %103, %105 : vector<16x64xf32>
    %cst_40 = arith.constant 0.000000e+00 : f32
    %107 = vector.broadcast %cst_40 : f32 to vector<16x64xf32>
    %108 = arith.maximumf %106, %107 : vector<16x64xf32>
    %109 = arith.truncf %108 : vector<16x64xf32> to vector<16x64xbf16>
    %c0_41 = arith.constant 0 : index
    %c0_42 = arith.constant 0 : index
    %110 = vector.load %arg11[%c0_41, %c0_42] : memref<64x32xbf16, #tpu.memory_space<vmem>>, vector<64x32xbf16>
    %cst_43 = arith.constant dense<0.000000e+00> : vector<16x32xf32>
    %111 = tpu.matmul %109, %110, %cst_43 {dimension_numbers = #tpu.dot_dimension_numbers<[1], [0], [0], [1], [0, 0, 1, 1], [], []>} : vector<16x64xbf16>, vector<64x32xbf16>, vector<16x32xf32> -> vector<16x32xf32>
    %c0_44 = arith.constant 0 : index
    %c0_45 = arith.constant 0 : index
    %112 = vector.load %arg12[%c0_44, %c0_45] : memref<1x32xf32, #tpu.memory_space<vmem>>, vector<1x32xf32>
    %113 = vector.broadcast %112 : vector<1x32xf32> to vector<16x32xf32>
    %114 = arith.addf %111, %113 : vector<16x32xf32>
    %115 = arith.addf %100, %114 : vector<16x32xf32>
    %c0_46 = arith.constant 0 : index
    %c0_47 = arith.constant 0 : index
    %116 = vector.load %arg13[%c0_46, %c0_47] : memref<1x32xf32, #tpu.memory_space<vmem>>, vector<1x32xf32>
    %c0_48 = arith.constant 0 : index
    %c0_49 = arith.constant 0 : index
    %117 = vector.load %arg14[%c0_48, %c0_49] : memref<1x32xf32, #tpu.memory_space<vmem>>, vector<1x32xf32>
    %cst_50 = arith.constant dense<0.000000e+00> : vector<16xf32>
    %118 = vector.multi_reduction <add>, %115, %cst_50 [1] : vector<16x32xf32> to vector<16xf32>
    %119 = vector.shape_cast %118 : vector<16xf32> to vector<16x1xf32>
    %cst_51 = arith.constant 3.200000e+01 : f32
    %120 = vector.broadcast %cst_51 : f32 to vector<16x1xf32>
    %121 = arith.divf %119, %120 : vector<16x1xf32>
    %122 = vector.broadcast %121 : vector<16x1xf32> to vector<16x32xf32>
    %123 = arith.subf %115, %122 : vector<16x32xf32>
    %124 = arith.mulf %123, %123 : vector<16x32xf32>
    %cst_52 = arith.constant dense<0.000000e+00> : vector<16xf32>
    %125 = vector.multi_reduction <add>, %124, %cst_52 [1] : vector<16x32xf32> to vector<16xf32>
    %126 = vector.shape_cast %125 : vector<16xf32> to vector<16x1xf32>
    %cst_53 = arith.constant 3.200000e+01 : f32
    %127 = vector.broadcast %cst_53 : f32 to vector<16x1xf32>
    %128 = arith.divf %126, %127 : vector<16x1xf32>
    %129 = vector.broadcast %121 : vector<16x1xf32> to vector<16x32xf32>
    %130 = arith.subf %115, %129 : vector<16x32xf32>
    %cst_54 = arith.constant 9.99999974E-6 : f32
    %131 = vector.broadcast %cst_54 : f32 to vector<16x1xf32>
    %132 = arith.addf %128, %131 : vector<16x1xf32>
    %133 = math.rsqrt %132 : vector<16x1xf32>
    %134 = vector.broadcast %133 : vector<16x1xf32> to vector<16x32xf32>
    %135 = arith.mulf %130, %134 : vector<16x32xf32>
    %136 = vector.broadcast %116 : vector<1x32xf32> to vector<16x32xf32>
    %137 = arith.mulf %135, %136 : vector<16x32xf32>
    %138 = vector.broadcast %117 : vector<1x32xf32> to vector<16x32xf32>
    %139 = arith.addf %137, %138 : vector<16x32xf32>
    %c0_55 = arith.constant 0 : index
    %c0_56 = arith.constant 0 : index
    %140 = vector.load %arg15[%c0_55, %c0_56] : memref<16x32xf32, #tpu.memory_space<vmem>>, vector<16x32xf32>
    tpu.vector_store %arg15[%c0_55, %c0_56], %139 {strides = array<i32>} : memref<16x32xf32, #tpu.memory_space<vmem>>, vector<16x32xf32>,
    return
  }
  func.func @transform_0(%arg0: i32) -> (i32, i32) {
    %c0_i32 = arith.constant 0 : i32
    %c0_i32_0 = arith.constant 0 : i32
    return %arg0, %c0_i32 : i32, i32
  }
  func.func @transform_1(%arg0: i32) -> (i32, i32, i32) {
    %c0_i32 = arith.constant 0 : i32
    %c0_i32_0 = arith.constant 0 : i32
    %c0_i32_1 = arith.constant 0 : i32
    return %arg0, %c0_i32, %c0_i32_0 : i32, i32, i32
  }
  func.func @transform_2(%arg0: i32) -> (i32, i32) {
    %c0_i32 = arith.constant 0 : i32
    %c0_i32_0 = arith.constant 0 : i32
    %c0_i32_1 = arith.constant 0 : i32
    return %c0_i32, %c0_i32_0 : i32, i32
  }
  func.func @transform_3(%arg0: i32) -> (i32, i32) {
    %c0_i32 = arith.constant 0 : i32
    %c0_i32_0 = arith.constant 0 : i32
    %c0_i32_1 = arith.constant 0 : i32
    return %c0_i32, %c0_i32_0 : i32, i32
  }
  func.func @transform_4(%arg0: i32) -> (i32, i32) {
    %c0_i32 = arith.constant 0 : i32
    %c0_i32_0 = arith.constant 0 : i32
    %c0_i32_1 = arith.constant 0 : i32
    return %c0_i32, %c0_i32_0 : i32, i32
  }
  func.func @transform_5(%arg0: i32) -> (i32, i32) {
    %c0_i32 = arith.constant 0 : i32
    %c0_i32_0 = arith.constant 0 : i32
    %c0_i32_1 = arith.constant 0 : i32
    return %c0_i32, %c0_i32_0 : i32, i32
  }
  func.func @transform_6(%arg0: i32) -> (i32, i32) {
    %c0_i32 = arith.constant 0 : i32
    %c0_i32_0 = arith.constant 0 : i32
    %c0_i32_1 = arith.constant 0 : i32
    return %c0_i32, %c0_i32_0 : i32, i32
  }
  func.func @transform_7(%arg0: i32) -> (i32, i32) {
    %c0_i32 = arith.constant 0 : i32
    %c0_i32_0 = arith.constant 0 : i32
    %c0_i32_1 = arith.constant 0 : i32
    return %c0_i32, %c0_i32_0 : i32, i32
  }
  func.func @transform_8(%arg0: i32) -> (i32, i32) {
    %c0_i32 = arith.constant 0 : i32
    %c0_i32_0 = arith.constant 0 : i32
    %c0_i32_1 = arith.constant 0 : i32
    return %c0_i32, %c0_i32_0 : i32, i32
  }
  func.func @transform_9(%arg0: i32) -> (i32, i32) {
    %c0_i32 = arith.constant 0 : i32
    %c0_i32_0 = arith.constant 0 : i32
    %c0_i32_1 = arith.constant 0 : i32
    return %c0_i32, %c0_i32_0 : i32, i32
  }
  func.func @transform_10(%arg0: i32) -> (i32, i32) {
    %c0_i32 = arith.constant 0 : i32
    %c0_i32_0 = arith.constant 0 : i32
    %c0_i32_1 = arith.constant 0 : i32
    return %c0_i32, %c0_i32_0 : i32, i32
  }
  func.func @transform_11(%arg0: i32) -> (i32, i32) {
    %c0_i32 = arith.constant 0 : i32
    %c0_i32_0 = arith.constant 0 : i32
    %c0_i32_1 = arith.constant 0 : i32
    return %c0_i32, %c0_i32_0 : i32, i32
  }
  func.func @transform_12(%arg0: i32) -> (i32, i32) {
    %c0_i32 = arith.constant 0 : i32
    %c0_i32_0 = arith.constant 0 : i32
    %c0_i32_1 = arith.constant 0 : i32
    return %c0_i32, %c0_i32_0 : i32, i32
  }
  func.func @transform_13(%arg0: i32) -> (i32, i32) {
    %c0_i32 = arith.constant 0 : i32
    %c0_i32_0 = arith.constant 0 : i32
    %c0_i32_1 = arith.constant 0 : i32
    return %c0_i32, %c0_i32_0 : i32, i32
  }
  func.func @transform_14(%arg0: i32) -> (i32, i32) {
    %c0_i32 = arith.constant 0 : i32
    %c0_i32_0 = arith.constant 0 : i32
    return %arg0, %c0_i32 : i32, i32
  }
}

</mosaic_0001>

<llo_original>
// kernel: tpu_custom_call.1
$region0: #{tpu_custom_call.1}
  #allocation0 [shape = 'u32[]', space=smem, size = 0x4, offset = 0x4, fixed_abs, tag = 'smem constant byte address 0x4 - core index']
  #allocation1 [shape = 'u32[144,128]{1,0:T(1,128)}', space=vmem, size = 0x12000, scoped, tag = 'internal scratch']
  %s0 = inlined_call_operand.hbm [shape: f32[16,32], index: 0, kind: input, shape index: {}]
  %s1 = inlined_call_operand.hbm [shape: s32[2,1,8], index: 1, kind: input, shape index: {}]
  %s2 = inlined_call_operand.hbm [shape: bf16[32,96], index: 2, kind: input, shape index: {}]
  %s3 = inlined_call_operand.hbm [shape: f32[1,96], index: 3, kind: input, shape index: {}]
  %s4 = inlined_call_operand.hbm [shape: bf16[32,32], index: 4, kind: input, shape index: {}]
  %s5 = inlined_call_operand.hbm [shape: f32[1,32], index: 5, kind: input, shape index: {}]
  %s6 = inlined_call_operand.hbm [shape: f32[1,32], index: 6, kind: input, shape index: {}]
  %s7 = inlined_call_operand.hbm [shape: f32[1,32], index: 7, kind: input, shape index: {}]
  %s8 = inlined_call_operand.hbm [shape: bf16[32,64], index: 8, kind: input, shape index: {}]
  %s9 = inlined_call_operand.hbm [shape: f32[1,64], index: 9, kind: input, shape index: {}]
  %s10 = inlined_call_operand.hbm [shape: bf16[64,32], index: 10, kind: input, shape index: {}]
  %s11 = inlined_call_operand.hbm [shape: f32[1,32], index: 11, kind: input, shape index: {}]
  %s12 = inlined_call_operand.hbm [shape: f32[1,32], index: 12, kind: input, shape index: {}]
  %s13 = inlined_call_operand.hbm [shape: f32[1,32], index: 13, kind: input, shape index: {}]
  %s14 = inlined_call_operand.hbm [shape: f32[16,32], index: 14, kind: output, shape index: {}]
  %s15 = sld [smem:[#allocation0]]
  $region122: #{tpu_custom_call.1} parent=0
    _
  %s17 = ssub.s32 1, %s15
  %s18 = scalar_select 0, %s17, %s15
  $region1: #{tpu_custom_call.1} parent=0
    #allocation2 [shape = 'u8[8192]{0}', space=vmem, size = 0x2000, scoped, tag = 'input window, operand 0, single buffered']
    #allocation3 [shape = 's32[1]{0}', space=sflag, size = 0x4, scoped, tag = 'scoped memory for tpu_custom_call.1']
    #allocation4 [shape = 's32[1]{0}', space=sflag, size = 0x4, scoped, tag = 'scoped memory for tpu_custom_call.1']
    #allocation5 [shape = 'u8[1024]{0}', space=vmem, size = 0x400, scoped, tag = 'input window, operand 1, single buffered']
    #allocation6 [shape = 's32[1]{0}', space=sflag, size = 0x4, scoped, tag = 'scoped memory for tpu_custom_call.1']
    #allocation7 [shape = 'u8[8192]{0}', space=vmem, size = 0x2000, scoped, tag = 'input window, operand 2, single buffered']
    #allocation8 [shape = 'u8[512]{0}', space=vmem, size = 0x400, scoped, tag = 'input window, operand 3, single buffered']
    #allocation9 [shape = 's32[1]{0}', space=sflag, size = 0x4, scoped, tag = 'scoped memory for tpu_custom_call.1']
    #allocation10 [shape = 'u8[8192]{0}', space=vmem, size = 0x2000, scoped, tag = 'input window, operand 4, single buffered']
    #allocation11 [shape = 'u8[512]{0}', space=vmem, size = 0x400, scoped, tag = 'input window, operand 5, single buffered']
    #allocation12 [shape = 's32[1]{0}', space=sflag, size = 0x4, scoped, tag = 'scoped memory for tpu_custom_call.1']
    #allocation13 [shape = 'u8[512]{0}', space=vmem, size = 0x400, scoped, tag = 'input window, operand 6, single buffered']
    #allocation14 [shape = 'u8[512]{0}', space=vmem, size = 0x400, scoped, tag = 'input window, operand 7, single buffered']
    #allocation15 [shape = 's32[1]{0}', space=sflag, size = 0x4, scoped, tag = 'scoped memory for tpu_custom_call.1']
    #allocation16 [shape = 'u8[8192]{0}', space=vmem, size = 0x2000, scoped, tag = 'input window, operand 8, single buffered']
    #allocation17 [shape = 'u8[512]{0}', space=vmem, size = 0x400, scoped, tag = 'input window, operand 9, single buffered']
    #allocation18 [shape = 's32[1]{0}', space=sflag, size = 0x4, scoped, tag = 'scoped memory for tpu_custom_call.1']
    #allocation19 [shape = 'u8[16384]{0}', space=vmem, size = 0x4000, scoped, tag = 'input window, operand 10, single buffered']
    #allocation20 [shape = 'u8[512]{0}', space=vmem, size = 0x400, scoped, tag = 'input window, operand 11, single buffered']
    #allocation21 [shape = 's32[1]{0}', space=sflag, size = 0x4, scoped, tag = 'scoped memory for tpu_custom_call.1']
    #allocation22 [shape = 'u8[512]{0}', space=vmem, size = 0x400, scoped, tag = 'input window, operand 12, single buffered']
    #allocation23 [shape = 'u8[512]{0}', space=vmem, size = 0x400, scoped, tag = 'input window, operand 13, single buffered']
    #allocation24 [shape = 's32[1]{0}', space=sflag, size = 0x4, scoped, tag = 'scoped memory for tpu_custom_call.1']
    #allocation25 [shape = 'u8[8192]{0}', space=vmem, size = 0x2000, scoped, tag = 'output window, operand 0, single buffered']
    %19 = vsyncpa [#allocation3], 0
    %20 = vsyncpa [#allocation6], 0
    %21 = vsyncpa [#allocation9], 0
    %22 = vsyncpa [#allocation12], 0
    %23 = vsyncpa [#allocation15], 0
    %24 = vsyncpa [#allocation18], 0
    %25 = vsyncpa [#allocation21], 0
    %26 = vsyncpa [#allocation24], 0
    %27 = vsyncpa [#allocation4], 0
    // Predicated region
    $region2: #{tpu_custom_call.1} parent=1 // pred_check
      _
    $region3: #{tpu_custom_call.1} parent=1 // pred_check_branch
      %29 = sbr.rel (0) target = $region5
    $region4: #{tpu_custom_call.1} parent=1 // pred_region
      %s31 = ssub.s32 256, 256
      %32 = vsyncadd [#allocation3], %s31
      %s33 = sshll.u32 [#allocation2], 4
      %s34 = int_to_ptr.vmem [resolvable:$true] %s33
      %39 = dma.hbm_to_vmem [thread:$0]  %s0, 256, %s34, [#allocation3], 128, 128, 8
    $region5: #{tpu_custom_call.1} parent=1 // pred_fallthru
      _
    // Predicated region
    $region6: #{tpu_custom_call.1} parent=1 // pred_check
      _
    $region7: #{tpu_custom_call.1} parent=1 // pred_check_branch
      %41 = sbr.rel (0) target = $region9
    $region8: #{tpu_custom_call.1} parent=1 // pred_region
      %s43 = ssub.s32 32, 32
      %44 = vsyncadd [#allocation6], %s43
      %s45 = sshll.u32 [#allocation5], 4
      %s46 = int_to_ptr.vmem [resolvable:$true] %s45
      %51 = dma.hbm_to_vmem [thread:$0]  %s1, 32, %s46, [#allocation6], 16, 16, 1
    $region9: #{tpu_custom_call.1} parent=1 // pred_fallthru
      _
    // Predicated region
    $region10: #{tpu_custom_call.1} parent=1 // pred_check
      _
    $region11: #{tpu_custom_call.1} parent=1 // pred_check_branch
      %53 = sbr.rel (0) target = $region13
    $region12: #{tpu_custom_call.1} parent=1 // pred_region
      %s55 = ssub.s32 256, 256
      %56 = vsyncadd [#allocation6], %s55
      %s57 = sshll.u32 [#allocation7], 4
      %s58 = int_to_ptr.vmem [resolvable:$true] %s57
      %63 = dma.hbm_to_vmem [thread:$0]  %s2, 256, %s58, [#allocation6], 64, 64, 4
    $region13: #{tpu_custom_call.1} parent=1 // pred_fallthru
      _
    // Predicated region
    $region14: #{tpu_custom_call.1} parent=1 // pred_check
      _
    $region15: #{tpu_custom_call.1} parent=1 // pred_check_branch
      %65 = sbr.rel (0) target = $region17
    $region16: #{tpu_custom_call.1} parent=1 // pred_region
      %s67 = ssub.s32 16, 16
      %68 = vsyncadd [#allocation9], %s67
      %s70 = sshll.u32 [#allocation8], 4
      %s71 = int_to_ptr.vmem [resolvable:$true] %s70
      %73 = dma.hbm_to_vmem [thread:$0]  %s3, 16, %s71, [#allocation9]
    $region17: #{tpu_custom_call.1} parent=1 // pred_fallthru
      _
    // Predicated region
    $region18: #{tpu_custom_call.1} parent=1 // pred_check
      _
    $region19: #{tpu_custom_call.1} parent=1 // pred_check_branch
      %75 = sbr.rel (0) target = $region21
    $region20: #{tpu_custom_call.1} parent=1 // pred_region
      %s77 = ssub.s32 256, 256
      %78 = vsyncadd [#allocation9], %s77
      %s79 = sshll.u32 [#allocation10], 4
      %s80 = int_to_ptr.vmem [resolvable:$true] %s79
      %85 = dma.hbm_to_vmem [thread:$0]  %s4, 256, %s80, [#allocation9], 64, 64, 4
    $region21: #{tpu_custom_call.1} parent=1 // pred_fallthru
      _
    // Predicated region
    $region22: #{tpu_custom_call.1} parent=1 // pred_check
      _
    $region23: #{tpu_custom_call.1} parent=1 // pred_check_branch
      %87 = sbr.rel (0) target = $region25
    $region24: #{tpu_custom_call.1} parent=1 // pred_region
      %s89 = ssub.s32 16, 16
      %90 = vsyncadd [#allocation12], %s89
      %s92 = sshll.u32 [#allocation11], 4
      %s93 = int_to_ptr.vmem [resolvable:$true] %s92
      %95 = dma.hbm_to_vmem [thread:$0]  %s5, 16, %s93, [#allocation12]
    $region25: #{tpu_custom_call.1} parent=1 // pred_fallthru
      _
    // Predicated region
    $region26: #{tpu_custom_call.1} parent=1 // pred_check
      _
    $region27: #{tpu_custom_call.1} parent=1 // pred_check_branch
      %97 = sbr.rel (0) target = $region29
    $region28: #{tpu_custom_call.1} parent=1 // pred_region
      %s99 = ssub.s32 16, 16
      %100 = vsyncadd [#allocation12], %s99
      %s102 = sshll.u32 [#allocation13], 4
      %s103 = int_to_ptr.vmem [resolvable:$true] %s102
      %105 = dma.hbm_to_vmem [thread:$0]  %s6, 16, %s103, [#allocation12]
    $region29: #{tpu_custom_call.1} parent=1 // pred_fallthru
      _
    // Predicated region
    $region30: #{tpu_custom_call.1} parent=1 // pred_check
      _
    $region31: #{tpu_custom_call.1} parent=1 // pred_check_branch
      %107 = sbr.rel (0) target = $region33
    $region32: #{tpu_custom_call.1} parent=1 // pred_region
      %s109 = ssub.s32 16, 16
      %110 = vsyncadd [#allocation15], %s109
      %s112 = sshll.u32 [#allocation14], 4
      %s113 = int_to_ptr.vmem [resolvable:$true] %s112
      %115 = dma.hbm_to_vmem [thread:$0]  %s7, 16, %s113, [#allocation15]
    $region33: #{tpu_custom_call.1} parent=1 // pred_fallthru
      _
    // Predicated region
    $region34: #{tpu_custom_call.1} parent=1 // pred_check
      _
    $region35: #{tpu_custom_call.1} parent=1 // pred_check_branch
      %117 = sbr.rel (0) target = $region37
    $region36: #{tpu_custom_call.1} parent=1 // pred_region
      %s119 = ssub.s32 256, 256
      %120 = vsyncadd [#allocation15], %s119
      %s121 = sshll.u32 [#allocation16], 4
      %s122 = int_to_ptr.vmem [resolvable:$true] %s121
      %127 = dma.hbm_to_vmem [thread:$0]  %s8, 256, %s122, [#allocation15], 64, 64, 4
    $region37: #{tpu_custom_call.1} parent=1 // pred_fallthru
      _
    // Predicated region
    $region38: #{tpu_custom_call.1} parent=1 // pred_check
      _
    $region39: #{tpu_custom_call.1} parent=1 // pred_check_branch
      %129 = sbr.rel (0) target = $region41
    $region40: #{tpu_custom_call.1} parent=1 // pred_region
      %s131 = ssub.s32 16, 16
      %132 = vsyncadd [#allocation18], %s131
      %s134 = sshll.u32 [#allocation17], 4
      %s135 = int_to_ptr.vmem [resolvable:$true] %s134
      %137 = dma.hbm_to_vmem [thread:$0]  %s9, 16, %s135, [#allocation18]
    $region41: #{tpu_custom_call.1} parent=1 // pred_fallthru
      _
    // Predicated region
    $region42: #{tpu_custom_call.1} parent=1 // pred_check
      _
    $region43: #{tpu_custom_call.1} parent=1 // pred_check_branch
      %139 = sbr.rel (0) target = $region45
    $region44: #{tpu_custom_call.1} parent=1 // pred_region
      %s141 = ssub.s32 512, 512
      %142 = vsyncadd [#allocation18], %s141
      %s143 = sshll.u32 [#allocation19], 4
      %s144 = int_to_ptr.vmem [resolvable:$true] %s143
      %149 = dma.hbm_to_vmem [thread:$0]  %s10, 512, %s144, [#allocation18], 64, 64, 4
    $region45: #{tpu_custom_call.1} parent=1 // pred_fallthru
      _
    // Predicated region
    $region46: #{tpu_custom_call.1} parent=1 // pred_check
      _
    $region47: #{tpu_custom_call.1} parent=1 // pred_check_branch
      %151 = sbr.rel (0) target = $region49
    $region48: #{tpu_custom_call.1} parent=1 // pred_region
      %s153 = ssub.s32 16, 16
      %154 = vsyncadd [#allocation21], %s153
      %s156 = sshll.u32 [#allocation20], 4
      %s157 = int_to_ptr.vmem [resolvable:$true] %s156
      %159 = dma.hbm_to_vmem [thread:$0]  %s11, 16, %s157, [#allocation21]
    $region49: #{tpu_custom_call.1} parent=1 // pred_fallthru
      _
    // Predicated region
    $region50: #{tpu_custom_call.1} parent=1 // pred_check
      _
    $region51: #{tpu_custom_call.1} parent=1 // pred_check_branch
      %161 = sbr.rel (0) target = $region53
    $region52: #{tpu_custom_call.1} parent=1 // pred_region
      %s163 = ssub.s32 16, 16
      %164 = vsyncadd [#allocation21], %s163
      %s166 = sshll.u32 [#allocation22], 4
      %s167 = int_to_ptr.vmem [resolvable:$true] %s166
      %169 = dma.hbm_to_vmem [thread:$0]  %s12, 16, %s167, [#allocation21]
    $region53: #{tpu_custom_call.1} parent=1 // pred_fallthru
      _
    // Predicated region
    $region54: #{tpu_custom_call.1} parent=1 // pred_check
      _
    $region55: #{tpu_custom_call.1} parent=1 // pred_check_branch
      %171 = sbr.rel (0) target = $region57
    $region56: #{tpu_custom_call.1} parent=1 // pred_region
      %s173 = ssub.s32 16, 16
      %174 = vsyncadd [#allocation24], %s173
      %s176 = sshll.u32 [#allocation23], 4
      %s177 = int_to_ptr.vmem [resolvable:$true] %s176
      %179 = dma.hbm_to_vmem [thread:$0]  %s13, 16, %s177, [#allocation24]
    $region57: #{tpu_custom_call.1} parent=1 // pred_fallthru
      _
    // Predicated region
    $region58: #{tpu_custom_call.1} parent=1 // pred_check
      _
    $region59: #{tpu_custom_call.1} parent=1 // pred_check_branch
      %181 = sbr.rel (0) target = $region61
    $region60: #{tpu_custom_call.1} parent=1 // pred_region
      %182 = dma.done [#allocation3], 256
    $region61: #{tpu_custom_call.1} parent=1 // pred_fallthru
      _
    // Predicated region
    $region62: #{tpu_custom_call.1} parent=1 // pred_check
      _
    $region63: #{tpu_custom_call.1} parent=1 // pred_check_branch
      %184 = sbr.rel (0) target = $region65
    $region64: #{tpu_custom_call.1} parent=1 // pred_region
      %185 = dma.done [#allocation6], 32
    $region65: #{tpu_custom_call.1} parent=1 // pred_fallthru
      _
    // Predicated region
    $region66: #{tpu_custom_call.1} parent=1 // pred_check
      _
    $region67: #{tpu_custom_call.1} parent=1 // pred_check_branch
      %187 = sbr.rel (0) target = $region69
    $region68: #{tpu_custom_call.1} parent=1 // pred_region
      %188 = dma.done [#allocation6], 256
    $region69: #{tpu_custom_call.1} parent=1 // pred_fallthru
      _
    // Predicated region
    $region70: #{tpu_custom_call.1} parent=1 // pred_check
      _
    $region71: #{tpu_custom_call.1} parent=1 // pred_check_branch
      %190 = sbr.rel (0) target = $region73
    $region72: #{tpu_custom_call.1} parent=1 // pred_region
      %191 = dma.done [#allocation9], 16
    $region73: #{tpu_custom_call.1} parent=1 // pred_fallthru
      _
    // Predicated region
    $region74: #{tpu_custom_call.1} parent=1 // pred_check
      _
    $region75: #{tpu_custom_call.1} parent=1 // pred_check_branch
      %193 = sbr.rel (0) target = $region77
    $region76: #{tpu_custom_call.1} parent=1 // pred_region
      %194 = dma.done [#allocation9], 256
    $region77: #{tpu_custom_call.1} parent=1 // pred_fallthru
      _
    // Predicated region
    $region78: #{tpu_custom_call.1} parent=1 // pred_check
      _
    $region79: #{tpu_custom_call.1} parent=1 // pred_check_branch
      %196 = sbr.rel (0) target = $region81
    $region80: #{tpu_custom_call.1} parent=1 // pred_region
      %197 = dma.done [#allocation12], 16
    $region81: #{tpu_custom_call.1} parent=1 // pred_fallthru
      _
    // Predicated region
    $region82: #{tpu_custom_call.1} parent=1 // pred_check
      _
    $region83: #{tpu_custom_call.1} parent=1 // pred_check_branch
      %199 = sbr.rel (0) target = $region85
    $region84: #{tpu_custom_call.1} parent=1 // pred_region
      %200 = dma.done [#allocation12], 16
    $region85: #{tpu_custom_call.1} parent=1 // pred_fallthru
      _
    // Predicated region
    $region86: #{tpu_custom_call.1} parent=1 // pred_check
      _
    $region87: #{tpu_custom_call.1} parent=1 // pred_check_branch
      %202 = sbr.rel (0) target = $region89
    $region88: #{tpu_custom_call.1} parent=1 // pred_region
      %203 = dma.done [#allocation15], 16
    $region89: #{tpu_custom_call.1} parent=1 // pred_fallthru
      _
    // Predicated region
    $region90: #{tpu_custom_call.1} parent=1 // pred_check
      _
    $region91: #{tpu_custom_call.1} parent=1 // pred_check_branch
      %205 = sbr.rel (0) target = $region93
    $region92: #{tpu_custom_call.1} parent=1 // pred_region
      %206 = dma.done [#allocation15], 256
    $region93: #{tpu_custom_call.1} parent=1 // pred_fallthru
      _
    // Predicated region
    $region94: #{tpu_custom_call.1} parent=1 // pred_check
      _
    $region95: #{tpu_custom_call.1} parent=1 // pred_check_branch
      %208 = sbr.rel (0) target = $region97
    $region96: #{tpu_custom_call.1} parent=1 // pred_region
      %209 = dma.done [#allocation18], 16
    $region97: #{tpu_custom_call.1} parent=1 // pred_fallthru
      _
    // Predicated region
    $region98: #{tpu_custom_call.1} parent=1 // pred_check
      _
    $region99: #{tpu_custom_call.1} parent=1 // pred_check_branch
      %211 = sbr.rel (0) target = $region101
    $region100: #{tpu_custom_call.1} parent=1 // pred_region
      %212 = dma.done [#allocation18], 512
    $region101: #{tpu_custom_call.1} parent=1 // pred_fallthru
      _
    // Predicated region
    $region102: #{tpu_custom_call.1} parent=1 // pred_check
      _
    $region103: #{tpu_custom_call.1} parent=1 // pred_check_branch
      %214 = sbr.rel (0) target = $region105
    $region104: #{tpu_custom_call.1} parent=1 // pred_region
      %215 = dma.done [#allocation21], 16
    $region105: #{tpu_custom_call.1} parent=1 // pred_fallthru
      _
    // Predicated region
    $region106: #{tpu_custom_call.1} parent=1 // pred_check
      _
    $region107: #{tpu_custom_call.1} parent=1 // pred_check_branch
      %217 = sbr.rel (0) target = $region109
    $region108: #{tpu_custom_call.1} parent=1 // pred_region
      %218 = dma.done [#allocation21], 16
    $region109: #{tpu_custom_call.1} parent=1 // pred_fallthru
      _
    // Predicated region
    $region110: #{tpu_custom_call.1} parent=1 // pred_check
      _
    $region111: #{tpu_custom_call.1} parent=1 // pred_check_branch
      %220 = sbr.rel (0) target = $region113
    $region112: #{tpu_custom_call.1} parent=1 // pred_region
      %221 = dma.done [#allocation24], 16
    $region113: #{tpu_custom_call.1} parent=1 // pred_fallthru
      _
    %v223 = vld [vmem:[#allocation2] sm:$0xff]
    %v224 = vld [vmem:[#allocation2 + $0x8] sm:$0xff]
    %v225 = vpack.c.bf16 %v224, %v223
    %v226 = vld [vmem:[#allocation7] sm:$0xf]
    %v227 = vld [vmem:[#allocation7 + $0x4] sm:$0xf]
    %v228 = vld [vmem:[#allocation7 + $0x8] sm:$0xf]
    %v229 = vld [vmem:[#allocation7 + $0xc] sm:$0xf]
    %v230 = vld [vmem:[#allocation8] sm:$0x1]
    %v232 = vlaneseq
    %v233 = vshrl.u32 %v232, 7
    %v234 = vsub.s32 0, %v233
    %v235 = vrot.slane %v230, %v234
    %v241 = vunpack.c.l.b16 %v226
    %v242 = vunpack.c.l.b16 %v227
    %v243 = vunpack.c.l.b16 %v228
    %v244 = vunpack.c.l.b16 %v229
    %v245 = vpack.c.b16 %v242, %v241
    %v246 = vpack.c.b16 %v244, %v243
    %vm249 = vcmask 261120
    %v251 = vsel %vm249, %v225, 0
    %253 = vmatprep.subr.bf16.mxu0 0
    %254 = vmatpush1.bf16.msra.mxu0 %v245
    %255 = vmatprep.subr.bf16.mxu0 0
    %256 = vmatpush1.bf16.msra.mxu0 %v246
    %257 = vmatprep.subr.bf16.mxu0 0
    %258 = vmatpush1.bf16.msra.mxu0 0
    %259 = vmatprep.subr.bf16.mxu0 0
    %260 = vmatpush1.bf16.msra.mxu0 0
    %261 = vmatprep.subr.bf16.mxu0 0
    %262 = vmatpush1.bf16.msra.mxu0 0
    %263 = vmatprep.subr.bf16.mxu0 0
    %264 = vmatpush1.bf16.msra.mxu0 0
    %265 = vmatprep.subr.bf16.mxu0 0
    %266 = vmatpush1.bf16.msra.mxu0 0
    %267 = vmatprep.subr.bf16.mxu0 0
    %268 = vmatpush1.bf16.msra.mxu0 0
    %269 = vmatprep.subr.bf16.mxu0 0
    %270 = vmatpush1.bf16.msra.mxu0 0
    %271 = vmatprep.subr.bf16.mxu0 0
    %272 = vmatpush1.bf16.msra.mxu0 0
    %273 = vmatprep.subr.bf16.mxu0 0
    %274 = vmatpush1.bf16.msra.mxu0 0
    %275 = vmatprep.subr.bf16.mxu0 0
    %276 = vmatpush1.bf16.msra.mxu0 0
    %277 = vmatprep.subr.bf16.mxu0 0
    %278 = vmatpush1.bf16.msra.mxu0 0
    %279 = vmatprep.subr.bf16.mxu0 0
    %280 = vmatpush1.bf16.msra.mxu0 0
    %281 = vmatprep.subr.bf16.mxu0 0
    %282 = vmatpush1.bf16.msra.mxu0 0
    %283 = vmatprep.subr.bf16.mxu0 0
    %284 = vmatpush1.bf16.msra.mxu0 0
    %285 = vmatprep.mubr.bf16.mxu0 0
    %286 = vmatmul.mubr.bf16.gmra.mrb[0].mxu0 %v251
    %v287 = vpop.f32.mrb[0].mxu0
    %v288 = vadd.f32 %v235, %v287
    %v289 = vpop.f32.mrb[0].mxu0
    %v290 = vpop.f32.mrb[0].mxu0
    %v291 = vadd.f32 %v235, %v290
    %v292 = vpop.f32.mrb[0].mxu0
    %293 = vdwg.mxu0
    %v294 = vld [vmem:[#allocation5] sm:$0x1]
    %v295 = vld [vmem:[#allocation5 + $0x1] sm:$0x1]
    %vm296 = vcmp.ne.s32.totalorder %v294, 0
    %vm297 = vcmp.ne.s32.totalorder %v295, 0
    %v298 = vpack.c.bf16 %v288, %v288
    %v299 = vpack.c.bf16 %v291, %v291
    %301 = vrot.lane.b32.xlu0 %v298, 96
    %v302 = vpop.permute.xlu0 %301
    %vm303 = vcmask 130048
    %v305 = vsel %vm303, %v298, 0
    %v308 = vsel %vm303, %v302, 0
    %310 = vmatprep.subr.bf16.mxu0 0
    %311 = vmatpush1.bf16.xpose.msra.mxu0 %v308
    %312 = vmatprep.subr.bf16.mxu0 0
    %313 = vmatpush1.bf16.xpose.msra.mxu0 0
    %314 = vmatprep.subr.bf16.mxu0 0
    %315 = vmatpush1.bf16.xpose.msra.mxu0 0
    %316 = vmatprep.subr.bf16.mxu0 0
    %317 = vmatpush1.bf16.xpose.msra.mxu0 0
    %318 = vmatprep.subr.bf16.mxu0 0
    %319 = vmatpush1.bf16.xpose.msra.mxu0 0
    %320 = vmatprep.subr.bf16.mxu0 0
    %321 = vmatpush1.bf16.xpose.msra.mxu0 0
    %322 = vmatprep.subr.bf16.mxu0 0
    %323 = vmatpush1.bf16.xpose.msra.mxu0 0
    %324 = vmatprep.subr.bf16.mxu0 0
    %325 = vmatpush1.bf16.xpose.msra.mxu0 0
    %326 = vmatprep.subr.bf16.mxu0 0
    %327 = vmatpush1.bf16.xpose.msra.mxu0 0
    %328 = vmatprep.subr.bf16.mxu0 0
    %329 = vmatpush1.bf16.xpose.msra.mxu0 0
    %330 = vmatprep.subr.bf16.mxu0 0
    %331 = vmatpush1.bf16.xpose.msra.mxu0 0
    %332 = vmatprep.subr.bf16.mxu0 0
    %333 = vmatpush1.bf16.xpose.msra.mxu0 0
    %334 = vmatprep.subr.bf16.mxu0 0
    %335 = vmatpush1.bf16.xpose.msra.mxu0 0
    %336 = vmatprep.subr.bf16.mxu0 0
    %337 = vmatpush1.bf16.xpose.msra.mxu0 0
    %338 = vmatprep.subr.bf16.mxu0 0
    %339 = vmatpush1.bf16.xpose.msra.mxu0 0
    %340 = vmatprep.subr.bf16.mxu0 0
    %341 = vmatpush1.bf16.xpose.msra.mxu0 0
    %342 = vmatprep.mubr.bf16.mxu0 0
    %343 = vmatmul.mubr.bf16.gmra.mrb[0].mxu0 %v305
    %v344 = vpop.f32.mrb[0].mxu0
    %v345 = vadd.f32 0.0, %v344
    %v346 = vpop.f32.mrb[0].mxu0
    %v347 = vpop.f32.mrb[0].mxu0
    %v348 = vpop.f32.mrb[0].mxu0
    %349 = vdwg.mxu0
    %351 = vrot.lane.b32.xlu0 %v299, 96
    %v352 = vpop.permute.xlu0 %351
    %v354 = vsel %vm303, %v299, 0
    %v357 = vsel %vm303, %v352, 0
    %359 = vmatprep.subr.bf16.mxu0 0
    %360 = vmatpush1.bf16.xpose.msra.mxu0 %v357
    %361 = vmatprep.subr.bf16.mxu0 0
    %362 = vmatpush1.bf16.xpose.msra.mxu0 0
    %363 = vmatprep.subr.bf16.mxu0 0
    %364 = vmatpush1.bf16.xpose.msra.mxu0 0
    %365 = vmatprep.subr.bf16.mxu0 0
    %366 = vmatpush1.bf16.xpose.msra.mxu0 0
    %367 = vmatprep.subr.bf16.mxu0 0
    %368 = vmatpush1.bf16.xpose.msra.mxu0 0
    %369 = vmatprep.subr.bf16.mxu0 0
    %370 = vmatpush1.bf16.xpose.msra.mxu0 0
    %371 = vmatprep.subr.bf16.mxu0 0
    %372 = vmatpush1.bf16.xpose.msra.mxu0 0
    %373 = vmatprep.subr.bf16.mxu0 0
    %374 = vmatpush1.bf16.xpose.msra.mxu0 0
    %375 = vmatprep.subr.bf16.mxu0 0
    %376 = vmatpush1.bf16.xpose.msra.mxu0 0
    %377 = vmatprep.subr.bf16.mxu0 0
    %378 = vmatpush1.bf16.xpose.msra.mxu0 0
    %379 = vmatprep.subr.bf16.mxu0 0
    %380 = vmatpush1.bf16.xpose.msra.mxu0 0
    %381 = vmatprep.subr.bf16.mxu0 0
    %382 = vmatpush1.bf16.xpose.msra.mxu0 0
    %383 = vmatprep.subr.bf16.mxu0 0
    %384 = vmatpush1.bf16.xpose.msra.mxu0 0
    %385 = vmatprep.subr.bf16.mxu0 0
    %386 = vmatpush1.bf16.xpose.msra.mxu0 0
    %387 = vmatprep.subr.bf16.mxu0 0
    %388 = vmatpush1.bf16.xpose.msra.mxu0 0
    %389 = vmatprep.subr.bf16.mxu0 0
    %390 = vmatpush1.bf16.xpose.msra.mxu0 0
    %391 = vmatprep.mubr.bf16.mxu0 0
    %392 = vmatmul.mubr.bf16.gmra.mrb[0].mxu0 %v354
    %v393 = vpop.f32.mrb[0].mxu0
    %v394 = vadd.f32 0.0, %v393
    %v395 = vpop.f32.mrb[0].mxu0
    %v396 = vpop.f32.mrb[0].mxu0
    %v397 = vpop.f32.mrb[0].mxu0
    %398 = vdwg.mxu0
    %v399 = vsel %vm296, 1, 0
    %v400 = vsel %vm297, 1, 0
    %v401 = vlaneseq
    %v402 = vshrl.u32 %v401, 7
    %v403 = vsub.s32 0, %v402
    %v404 = vrot.slane %v399, %v403
    %v405 = vlaneseq
    %v406 = vshrl.u32 %v405, 7
    %v407 = vsub.s32 0, %v406
    %v408 = vrot.slane %v400, %v407
    %vm409 = vcmp.eq.s32.totalorder %v404, 1
    %vm410 = vcmp.eq.s32.totalorder %v408, 1
    %v411 = vsel %vm409, %v345, -1000000.0
    %v412 = vsel %vm410, %v394, -1000000.0
    %vm413 = vcmask 64512
    %v414 = vsel %vm413, %v411, -inf
    %415 = vmax.xlane.f32.xlu0 %v414
    %v416 = vpop.xlane.xlu0 %415
    %v417 = vsel %vm413, %v412, -inf
    %418 = vmax.xlane.f32.xlu0 %v417
    %v419 = vpop.xlane.xlu0 %418
    %v420 = vsub.f32 %v411, %v416
    %v421 = vsub.f32 %v412, %v419
    %v422 = vmul.f32 %v420, 1.442695
    %v423 = vpow.pop %v422
    %v424 = vmul.f32 %v421, 1.442695
    %v425 = vpow.pop %v424
    %v426 = vsel %vm413, %v423, 0.0
    %427 = vadd.xlane.f32.xlu0 %v426
    %v428 = vpop.xlane.xlu0 %427
    %v429 = vsel %vm413, %v425, 0.0
    %430 = vadd.xlane.f32.xlu0 %v429
    %v431 = vpop.xlane.xlu0 %430
    %v432 = vrcp.pop %v428
    %v433 = vrcp.pop %v431
    %v434 = vmul.f32 %v423, %v432
    %v435 = vmul.f32 %v425, %v433
    %v436 = vpack.c.bf16 %v434, %v434
    %v437 = vpack.c.bf16 %v435, %v435
    %438 = vrot.lane.b32.xlu0 %v298, 64
    %v439 = vpop.permute.xlu0 %438
    %v441 = vsel %vm413, %v436, 0
    %vm443 = vcmask 1043456
    %v445 = vsel %vm443, %v439, 0
    %447 = vmatprep.subr.bf16.mxu0 0
    %448 = vmatpush1.bf16.msra.mxu0 %v445
    %449 = vmatprep.subr.bf16.mxu0 0
    %450 = vmatpush1.bf16.msra.mxu0 0
    %451 = vmatprep.subr.bf16.mxu0 0
    %452 = vmatpush1.bf16.msra.mxu0 0
    %453 = vmatprep.subr.bf16.mxu0 0
    %454 = vmatpush1.bf16.msra.mxu0 0
    %455 = vmatprep.subr.bf16.mxu0 0
    %456 = vmatpush1.bf16.msra.mxu0 0
    %457 = vmatprep.subr.bf16.mxu0 0
    %458 = vmatpush1.bf16.msra.mxu0 0
    %459 = vmatprep.subr.bf16.mxu0 0
    %460 = vmatpush1.bf16.msra.mxu0 0
    %461 = vmatprep.subr.bf16.mxu0 0
    %462 = vmatpush1.bf16.msra.mxu0 0
    %463 = vmatprep.subr.bf16.mxu0 0
    %464 = vmatpush1.bf16.msra.mxu0 0
    %465 = vmatprep.subr.bf16.mxu0 0
    %466 = vmatpush1.bf16.msra.mxu0 0
    %467 = vmatprep.subr.bf16.mxu0 0
    %468 = vmatpush1.bf16.msra.mxu0 0
    %469 = vmatprep.subr.bf16.mxu0 0
    %470 = vmatpush1.bf16.msra.mxu0 0
    %471 = vmatprep.subr.bf16.mxu0 0
    %472 = vmatpush1.bf16.msra.mxu0 0
    %473 = vmatprep.subr.bf16.mxu0 0
    %474 = vmatpush1.bf16.msra.mxu0 0
    %475 = vmatprep.subr.bf16.mxu0 0
    %476 = vmatpush1.bf16.msra.mxu0 0
    %477 = vmatprep.subr.bf16.mxu0 0
    %478 = vmatpush1.bf16.msra.mxu0 0
    %479 = vmatprep.mubr.bf16.mxu0 0
    %480 = vmatmul.mubr.bf16.gmra.mrb[0].mxu0 %v441
    %v481 = vpop.f32.mrb[0].mxu0
    %v482 = vadd.f32 0.0, %v481
    %v483 = vpop.f32.mrb[0].mxu0
    %v484 = vpop.f32.mrb[0].mxu0
    %v485 = vpop.f32.mrb[0].mxu0
    %486 = vdwg.mxu0
    %487 = vrot.lane.b32.xlu0 %v299, 64
    %v488 = vpop.permute.xlu0 %487
    %v490 = vsel %vm413, %v437, 0
    %v493 = vsel %vm443, %v488, 0
    %495 = vmatprep.subr.bf16.mxu0 0
    %496 = vmatpush1.bf16.msra.mxu0 %v493
    %497 = vmatprep.subr.bf16.mxu0 0
    %498 = vmatpush1.bf16.msra.mxu0 0
    %499 = vmatprep.subr.bf16.mxu0 0
    %500 = vmatpush1.bf16.msra.mxu0 0
    %501 = vmatprep.subr.bf16.mxu0 0
    %502 = vmatpush1.bf16.msra.mxu0 0
    %503 = vmatprep.subr.bf16.mxu0 0
    %504 = vmatpush1.bf16.msra.mxu0 0
    %505 = vmatprep.subr.bf16.mxu0 0
    %506 = vmatpush1.bf16.msra.mxu0 0
    %507 = vmatprep.subr.bf16.mxu0 0
    %508 = vmatpush1.bf16.msra.mxu0 0
    %509 = vmatprep.subr.bf16.mxu0 0
    %510 = vmatpush1.bf16.msra.mxu0 0
    %511 = vmatprep.subr.bf16.mxu0 0
    %512 = vmatpush1.bf16.msra.mxu0 0
    %513 = vmatprep.subr.bf16.mxu0 0
    %514 = vmatpush1.bf16.msra.mxu0 0
    %515 = vmatprep.subr.bf16.mxu0 0
    %516 = vmatpush1.bf16.msra.mxu0 0
    %517 = vmatprep.subr.bf16.mxu0 0
    %518 = vmatpush1.bf16.msra.mxu0 0
    %519 = vmatprep.subr.bf16.mxu0 0
    %520 = vmatpush1.bf16.msra.mxu0 0
    %521 = vmatprep.subr.bf16.mxu0 0
    %522 = vmatpush1.bf16.msra.mxu0 0
    %523 = vmatprep.subr.bf16.mxu0 0
    %524 = vmatpush1.bf16.msra.mxu0 0
    %525 = vmatprep.subr.bf16.mxu0 0
    %526 = vmatpush1.bf16.msra.mxu0 0
    %527 = vmatprep.mubr.bf16.mxu0 0
    %528 = vmatmul.mubr.bf16.gmra.mrb[0].mxu0 %v490
    %v529 = vpop.f32.mrb[0].mxu0
    %v530 = vadd.f32 0.0, %v529
    %v531 = vpop.f32.mrb[0].mxu0
    %v532 = vpop.f32.mrb[0].mxu0
    %v533 = vpop.f32.mrb[0].mxu0
    %534 = vdwg.mxu0
    %v535 = vpack.c.bf16 %v530, %v482
    %v536 = vld [vmem:[#allocation10] sm:$0xf]
    %v537 = vld [vmem:[#allocation10 + $0x4] sm:$0xf]
    %538 = vrot.lane.b32.xlu0 %v298, 112
    %v539 = vpop.permute.xlu0 %538
    %540 = vrot.lane.b32.xlu0 %v298, 80
    %v541 = vpop.permute.xlu0 %540
    %v543 = vsel %vm303, %v539, 0
    %v546 = vsel %vm303, %v541, 0
    %548 = vmatprep.subr.bf16.mxu0 0
    %549 = vmatpush1.bf16.xpose.msra.mxu0 %v546
    %550 = vmatprep.subr.bf16.mxu0 0
    %551 = vmatpush1.bf16.xpose.msra.mxu0 0
    %552 = vmatprep.subr.bf16.mxu0 0
    %553 = vmatpush1.bf16.xpose.msra.mxu0 0
    %554 = vmatprep.subr.bf16.mxu0 0
    %555 = vmatpush1.bf16.xpose.msra.mxu0 0
    %556 = vmatprep.subr.bf16.mxu0 0
    %557 = vmatpush1.bf16.xpose.msra.mxu0 0
    %558 = vmatprep.subr.bf16.mxu0 0
    %559 = vmatpush1.bf16.xpose.msra.mxu0 0
    %560 = vmatprep.subr.bf16.mxu0 0
    %561 = vmatpush1.bf16.xpose.msra.mxu0 0
    %562 = vmatprep.subr.bf16.mxu0 0
    %563 = vmatpush1.bf16.xpose.msra.mxu0 0
    %564 = vmatprep.subr.bf16.mxu0 0
    %565 = vmatpush1.bf16.xpose.msra.mxu0 0
    %566 = vmatprep.subr.bf16.mxu0 0
    %567 = vmatpush1.bf16.xpose.msra.mxu0 0
    %568 = vmatprep.subr.bf16.mxu0 0
    %569 = vmatpush1.bf16.xpose.msra.mxu0 0
    %570 = vmatprep.subr.bf16.mxu0 0
    %571 = vmatpush1.bf16.xpose.msra.mxu0 0
    %572 = vmatprep.subr.bf16.mxu0 0
    %573 = vmatpush1.bf16.xpose.msra.mxu0 0
    %574 = vmatprep.subr.bf16.mxu0 0
    %575 = vmatpush1.bf16.xpose.msra.mxu0 0
    %576 = vmatprep.subr.bf16.mxu0 0
    %577 = vmatpush1.bf16.xpose.msra.mxu0 0
    %578 = vmatprep.subr.bf16.mxu0 0
    %579 = vmatpush1.bf16.xpose.msra.mxu0 0
    %580 = vmatprep.mubr.bf16.mxu0 0
    %581 = vmatmul.mubr.bf16.gmra.mrb[0].mxu0 %v543
    %v582 = vpop.f32.mrb[0].mxu0
    %v583 = vadd.f32 0.0, %v582
    %v584 = vpop.f32.mrb[0].mxu0
    %v585 = vpop.f32.mrb[0].mxu0
    %v586 = vpop.f32.mrb[0].mxu0
    %587 = vdwg.mxu0
    %588 = vrot.lane.b32.xlu0 %v299, 112
    %v589 = vpop.permute.xlu0 %588
    %590 = vrot.lane.b32.xlu0 %v299, 80
    %v591 = vpop.permute.xlu0 %590
    %v593 = vsel %vm303, %v589, 0
    %v596 = vsel %vm303, %v591, 0
    %598 = vmatprep.subr.bf16.mxu0 0
    %599 = vmatpush1.bf16.xpose.msra.mxu0 %v596
    %600 = vmatprep.subr.bf16.mxu0 0
    %601 = vmatpush1.bf16.xpose.msra.mxu0 0
    %602 = vmatprep.subr.bf16.mxu0 0
    %603 = vmatpush1.bf16.xpose.msra.mxu0 0
    %604 = vmatprep.subr.bf16.mxu0 0
    %605 = vmatpush1.bf16.xpose.msra.mxu0 0
    %606 = vmatprep.subr.bf16.mxu0 0
    %607 = vmatpush1.bf16.xpose.msra.mxu0 0
    %608 = vmatprep.subr.bf16.mxu0 0
    %609 = vmatpush1.bf16.xpose.msra.mxu0 0
    %610 = vmatprep.subr.bf16.mxu0 0
    %611 = vmatpush1.bf16.xpose.msra.mxu0 0
    %612 = vmatprep.subr.bf16.mxu0 0
    %613 = vmatpush1.bf16.xpose.msra.mxu0 0
    %614 = vmatprep.subr.bf16.mxu0 0
    %615 = vmatpush1.bf16.xpose.msra.mxu0 0
    %616 = vmatprep.subr.bf16.mxu0 0
    %617 = vmatpush1.bf16.xpose.msra.mxu0 0
    %618 = vmatprep.subr.bf16.mxu0 0
    %619 = vmatpush1.bf16.xpose.msra.mxu0 0
    %620 = vmatprep.subr.bf16.mxu0 0
    %621 = vmatpush1.bf16.xpose.msra.mxu0 0
    %622 = vmatprep.subr.bf16.mxu0 0
    %623 = vmatpush1.bf16.xpose.msra.mxu0 0
    %624 = vmatprep.subr.bf16.mxu0 0
    %625 = vmatpush1.bf16.xpose.msra.mxu0 0
    %626 = vmatprep.subr.bf16.mxu0 0
    %627 = vmatpush1.bf16.xpose.msra.mxu0 0
    %628 = vmatprep.subr.bf16.mxu0 0
    %629 = vmatpush1.bf16.xpose.msra.mxu0 0
    %630 = vmatprep.mubr.bf16.mxu0 0
    %631 = vmatmul.mubr.bf16.gmra.mrb[0].mxu0 %v593
    %v632 = vpop.f32.mrb[0].mxu0
    %v633 = vadd.f32 0.0, %v632
    %v634 = vpop.f32.mrb[0].mxu0
    %v635 = vpop.f32.mrb[0].mxu0
    %v636 = vpop.f32.mrb[0].mxu0
    %637 = vdwg.mxu0
    %v638 = vsel %vm409, %v583, -1000000.0
    %v639 = vsel %vm410, %v633, -1000000.0
    %v640 = vsel %vm413, %v638, -inf
    %641 = vmax.xlane.f32.xlu0 %v640
    %v642 = vpop.xlane.xlu0 %641
    %v643 = vsel %vm413, %v639, -inf
    %644 = vmax.xlane.f32.xlu0 %v643
    %v645 = vpop.xlane.xlu0 %644
    %v646 = vsub.f32 %v638, %v642
    %v647 = vsub.f32 %v639, %v645
    %v648 = vmul.f32 %v646, 1.442695
    %v649 = vpow.pop %v648
    %v650 = vmul.f32 %v647, 1.442695
    %v651 = vpow.pop %v650
    %v652 = vsel %vm413, %v649, 0.0
    %653 = vadd.xlane.f32.xlu0 %v652
    %v654 = vpop.xlane.xlu0 %653
    %v655 = vsel %vm413, %v651, 0.0
    %656 = vadd.xlane.f32.xlu0 %v655
    %v657 = vpop.xlane.xlu0 %656
    %v658 = vrcp.pop %v654
    %v659 = vrcp.pop %v657
    %v660 = vmul.f32 %v649, %v658
    %v661 = vmul.f32 %v651, %v659
    %v662 = vpack.c.bf16 %v660, %v660
    %v663 = vpack.c.bf16 %v661, %v661
    %664 = vrot.lane.b32.xlu0 %v298, 48
    %v665 = vpop.permute.xlu0 %664
    %v667 = vsel %vm413, %v662, 0
    %v670 = vsel %vm443, %v665, 0
    %672 = vmatprep.subr.bf16.mxu0 0
    %673 = vmatpush1.bf16.msra.mxu0 %v670
    %674 = vmatprep.subr.bf16.mxu0 0
    %675 = vmatpush1.bf16.msra.mxu0 0
    %676 = vmatprep.subr.bf16.mxu0 0
    %677 = vmatpush1.bf16.msra.mxu0 0
    %678 = vmatprep.subr.bf16.mxu0 0
    %679 = vmatpush1.bf16.msra.mxu0 0
    %680 = vmatprep.subr.bf16.mxu0 0
    %681 = vmatpush1.bf16.msra.mxu0 0
    %682 = vmatprep.subr.bf16.mxu0 0
    %683 = vmatpush1.bf16.msra.mxu0 0
    %684 = vmatprep.subr.bf16.mxu0 0
    %685 = vmatpush1.bf16.msra.mxu0 0
    %686 = vmatprep.subr.bf16.mxu0 0
    %687 = vmatpush1.bf16.msra.mxu0 0
    %688 = vmatprep.subr.bf16.mxu0 0
    %689 = vmatpush1.bf16.msra.mxu0 0
    %690 = vmatprep.subr.bf16.mxu0 0
    %691 = vmatpush1.bf16.msra.mxu0 0
    %692 = vmatprep.subr.bf16.mxu0 0
    %693 = vmatpush1.bf16.msra.mxu0 0
    %694 = vmatprep.subr.bf16.mxu0 0
    %695 = vmatpush1.bf16.msra.mxu0 0
    %696 = vmatprep.subr.bf16.mxu0 0
    %697 = vmatpush1.bf16.msra.mxu0 0
    %698 = vmatprep.subr.bf16.mxu0 0
    %699 = vmatpush1.bf16.msra.mxu0 0
    %700 = vmatprep.subr.bf16.mxu0 0
    %701 = vmatpush1.bf16.msra.mxu0 0
    %702 = vmatprep.subr.bf16.mxu0 0
    %703 = vmatpush1.bf16.msra.mxu0 0
    %704 = vmatprep.mubr.bf16.mxu0 0
    %705 = vmatmul.mubr.bf16.gmra.mrb[0].mxu0 %v667
    %v706 = vpop.f32.mrb[0].mxu0
    %v707 = vadd.f32 0.0, %v706
    %v708 = vpop.f32.mrb[0].mxu0
    %v709 = vpop.f32.mrb[0].mxu0
    %v710 = vpop.f32.mrb[0].mxu0
    %711 = vdwg.mxu0
    %712 = vrot.lane.b32.xlu0 %v299, 48
    %v713 = vpop.permute.xlu0 %712
    %v715 = vsel %vm413, %v663, 0
    %v718 = vsel %vm443, %v713, 0
    %720 = vmatprep.subr.bf16.mxu0 0
    %721 = vmatpush1.bf16.msra.mxu0 %v718
    %722 = vmatprep.subr.bf16.mxu0 0
    %723 = vmatpush1.bf16.msra.mxu0 0
    %724 = vmatprep.subr.bf16.mxu0 0
    %725 = vmatpush1.bf16.msra.mxu0 0
    %726 = vmatprep.subr.bf16.mxu0 0
    %727 = vmatpush1.bf16.msra.mxu0 0
    %728 = vmatprep.subr.bf16.mxu0 0
    %729 = vmatpush1.bf16.msra.mxu0 0
    %730 = vmatprep.subr.bf16.mxu0 0
    %731 = vmatpush1.bf16.msra.mxu0 0
    %732 = vmatprep.subr.bf16.mxu0 0
    %733 = vmatpush1.bf16.msra.mxu0 0
    %734 = vmatprep.subr.bf16.mxu0 0
    %735 = vmatpush1.bf16.msra.mxu0 0
    %736 = vmatprep.subr.bf16.mxu0 0
    %737 = vmatpush1.bf16.msra.mxu0 0
    %738 = vmatprep.subr.bf16.mxu0 0
    %739 = vmatpush1.bf16.msra.mxu0 0
    %740 = vmatprep.subr.bf16.mxu0 0
    %741 = vmatpush1.bf16.msra.mxu0 0
    %742 = vmatprep.subr.bf16.mxu0 0
    %743 = vmatpush1.bf16.msra.mxu0 0
    %744 = vmatprep.subr.bf16.mxu0 0
    %745 = vmatpush1.bf16.msra.mxu0 0
    %746 = vmatprep.subr.bf16.mxu0 0
    %747 = vmatpush1.bf16.msra.mxu0 0
    %748 = vmatprep.subr.bf16.mxu0 0
    %749 = vmatpush1.bf16.msra.mxu0 0
    %750 = vmatprep.subr.bf16.mxu0 0
    %751 = vmatpush1.bf16.msra.mxu0 0
    %752 = vmatprep.mubr.bf16.mxu0 0
    %753 = vmatmul.mubr.bf16.gmra.mrb[0].mxu0 %v715
    %v754 = vpop.f32.mrb[0].mxu0
    %v755 = vadd.f32 0.0, %v754
    %v756 = vpop.f32.mrb[0].mxu0
    %v757 = vpop.f32.mrb[0].mxu0
    %v758 = vpop.f32.mrb[0].mxu0
    %759 = vdwg.mxu0
    %v760 = vpack.c.bf16 %v755, %v707
    %v761 = vld [vmem:[#allocation10 + $0x8] sm:$0xf]
    %v762 = vld [vmem:[#allocation10 + $0xc] sm:$0xf]
    %v765 = vunpack.c.l.b16 %v761
    %v766 = vunpack.c.l.b16 %v762
    %v767 = vpack.c.b16 %v766, %v765
    %v770 = vsel %vm303, %v760, 0
    %772 = vmatprep.subr.bf16.mxu0 0
    %773 = vmatpush1.bf16.msra.mxu0 %v767
    %774 = vmatprep.subr.bf16.mxu0 0
    %775 = vmatpush1.bf16.msra.mxu0 0
    %776 = vmatprep.subr.bf16.mxu0 0
    %777 = vmatpush1.bf16.msra.mxu0 0
    %778 = vmatprep.subr.bf16.mxu0 0
    %779 = vmatpush1.bf16.msra.mxu0 0
    %780 = vmatprep.subr.bf16.mxu0 0
    %781 = vmatpush1.bf16.msra.mxu0 0
    %782 = vmatprep.subr.bf16.mxu0 0
    %783 = vmatpush1.bf16.msra.mxu0 0
    %784 = vmatprep.subr.bf16.mxu0 0
    %785 = vmatpush1.bf16.msra.mxu0 0
    %786 = vmatprep.subr.bf16.mxu0 0
    %787 = vmatpush1.bf16.msra.mxu0 0
    %788 = vmatprep.subr.bf16.mxu0 0
    %789 = vmatpush1.bf16.msra.mxu0 0
    %790 = vmatprep.subr.bf16.mxu0 0
    %791 = vmatpush1.bf16.msra.mxu0 0
    %792 = vmatprep.subr.bf16.mxu0 0
    %793 = vmatpush1.bf16.msra.mxu0 0
    %794 = vmatprep.subr.bf16.mxu0 0
    %795 = vmatpush1.bf16.msra.mxu0 0
    %796 = vmatprep.subr.bf16.mxu0 0
    %797 = vmatpush1.bf16.msra.mxu0 0
    %798 = vmatprep.subr.bf16.mxu0 0
    %799 = vmatpush1.bf16.msra.mxu0 0
    %800 = vmatprep.subr.bf16.mxu0 0
    %801 = vmatpush1.bf16.msra.mxu0 0
    %802 = vmatprep.subr.bf16.mxu0 0
    %803 = vmatpush1.bf16.msra.mxu0 0
    %804 = vmatprep.mubr.bf16.mxu0 0
    %805 = vmatmul.mubr.bf16.gmra.mrb[0].mxu0 %v770
    %v806 = vpop.f32.mrb[0].mxu0
    %v807 = vadd.f32 0.0, %v806
    %v808 = vpop.f32.mrb[0].mxu0
    %v809 = vpop.f32.mrb[0].mxu0
    %v810 = vadd.f32 0.0, %v809
    %v811 = vpop.f32.mrb[0].mxu0
    %812 = vdwg.mxu0
    %v815 = vunpack.c.l.b16 %v536
    %v816 = vunpack.c.l.b16 %v537
    %v817 = vpack.c.b16 %v816, %v815
    %v820 = vsel %vm303, %v535, 0
    %822 = vmatprep.subr.bf16.mxu0 0
    %823 = vmatpush1.bf16.msra.mxu0 %v817
    %824 = vmatprep.subr.bf16.mxu0 0
    %825 = vmatpush1.bf16.msra.mxu0 0
    %826 = vmatprep.subr.bf16.mxu0 0
    %827 = vmatpush1.bf16.msra.mxu0 0
    %828 = vmatprep.subr.bf16.mxu0 0
    %829 = vmatpush1.bf16.msra.mxu0 0
    %830 = vmatprep.subr.bf16.mxu0 0
    %831 = vmatpush1.bf16.msra.mxu0 0
    %832 = vmatprep.subr.bf16.mxu0 0
    %833 = vmatpush1.bf16.msra.mxu0 0
    %834 = vmatprep.subr.bf16.mxu0 0
    %835 = vmatpush1.bf16.msra.mxu0 0
    %836 = vmatprep.subr.bf16.mxu0 0
    %837 = vmatpush1.bf16.msra.mxu0 0
    %838 = vmatprep.subr.bf16.mxu0 0
    %839 = vmatpush1.bf16.msra.mxu0 0
    %840 = vmatprep.subr.bf16.mxu0 0
    %841 = vmatpush1.bf16.msra.mxu0 0
    %842 = vmatprep.subr.bf16.mxu0 0
    %843 = vmatpush1.bf16.msra.mxu0 0
    %844 = vmatprep.subr.bf16.mxu0 0
    %845 = vmatpush1.bf16.msra.mxu0 0
    %846 = vmatprep.subr.bf16.mxu0 0
    %847 = vmatpush1.bf16.msra.mxu0 0
    %848 = vmatprep.subr.bf16.mxu0 0
    %849 = vmatpush1.bf16.msra.mxu0 0
    %850 = vmatprep.subr.bf16.mxu0 0
    %851 = vmatpush1.bf16.msra.mxu0 0
    %852 = vmatprep.subr.bf16.mxu0 0
    %853 = vmatpush1.bf16.msra.mxu0 0
    %854 = vmatprep.mubr.bf16.mxu0 0
    %855 = vmatmul.mubr.bf16.gmra.mrb[0].mxu0 %v820
    %v856 = vpop.f32.mrb[0].mxu0
    %v857 = vadd.f32 %v807, %v856
    %v858 = vpop.f32.mrb[0].mxu0
    %v859 = vpop.f32.mrb[0].mxu0
    %v860 = vadd.f32 %v810, %v859
    %v861 = vpop.f32.mrb[0].mxu0
    %862 = vdwg.mxu0
    %v863 = vld [vmem:[#allocation11] sm:$0x1]
    %v865 = vlaneseq
    %v866 = vshrl.u32 %v865, 7
    %v867 = vsub.s32 0, %v866
    %v868 = vrot.slane %v863, %v867
    %v870 = vadd.f32 %v857, %v868
    %v871 = vadd.f32 %v860, %v868
    %v872 = vadd.f32 %v223, %v870
    %v873 = vadd.f32 %v224, %v871
    %v874 = vld [vmem:[#allocation13] sm:$0x1]
    %v875 = vld [vmem:[#allocation14] sm:$0x1]
    %v876 = vsel %vm249, %v872, 0.0
    %877 = vadd.xlane.f32.xlu0 %v876
    %v878 = vpop.xlane.xlu0 %877
    %v879 = vsel %vm249, %v873, 0.0
    %880 = vadd.xlane.f32.xlu0 %v879
    %v881 = vpop.xlane.xlu0 %880
    %v882 = vrcp.pop 32.0
    %v883 = vmul.f32 %v878, %v882
    %v884 = vmul.f32 %v881, %v882
    %v885 = vsub.f32 %v872, %v883
    %v886 = vsub.f32 %v873, %v884
    %v887 = vmul.f32 %v885, %v885
    %v888 = vmul.f32 %v886, %v886
    %v889 = vsel %vm249, %v887, 0.0
    %890 = vadd.xlane.f32.xlu0 %v889
    %v891 = vpop.xlane.xlu0 %890
    %v892 = vsel %vm249, %v888, 0.0
    %893 = vadd.xlane.f32.xlu0 %v892
    %v894 = vpop.xlane.xlu0 %893
    %v895 = vmul.f32 %v891, %v882
    %v896 = vmul.f32 %v894, %v882
    %v897 = vadd.f32 %v895, 1e-05
    %v898 = vadd.f32 %v896, 1e-05
    %v899 = vrsqrt.pop %v897
    %v900 = vrsqrt.pop %v898
    %v901 = vmul.f32 %v885, %v899
    %v902 = vmul.f32 %v886, %v900
    %v904 = vlaneseq
    %v905 = vshrl.u32 %v904, 7
    %v906 = vsub.s32 0, %v905
    %v907 = vrot.slane %v874, %v906
    %v909 = vmul.f32 %v901, %v907
    %v910 = vmul.f32 %v902, %v907
    %v912 = vlaneseq
    %v913 = vshrl.u32 %v912, 7
    %v914 = vsub.s32 0, %v913
    %v915 = vrot.slane %v875, %v914
    %v917 = vadd.f32 %v909, %v915
    %v918 = vadd.f32 %v910, %v915
    %v919 = vpack.c.bf16 %v918, %v917
    %v920 = vld [vmem:[#allocation16] sm:$0xf]
    %v921 = vld [vmem:[#allocation16 + $0x4] sm:$0xf]
    %v922 = vld [vmem:[#allocation16 + $0x8] sm:$0xf]
    %v923 = vld [vmem:[#allocation16 + $0xc] sm:$0xf]
    %v924 = vld [vmem:[#allocation17] sm:$0x1]
    %v926 = vlaneseq
    %v927 = vshrl.u32 %v926, 7
    %v928 = vsub.s32 0, %v927
    %v929 = vrot.slane %v924, %v928
    %v935 = vunpack.c.l.b16 %v920
    %v936 = vunpack.c.l.b16 %v921
    %v937 = vunpack.c.l.b16 %v922
    %v938 = vunpack.c.l.b16 %v923
    %v939 = vpack.c.b16 %v936, %v935
    %v940 = vpack.c.b16 %v938, %v937
    %v944 = vsel %vm249, %v919, 0
    %946 = vmatprep.subr.bf16.mxu0 0
    %947 = vmatpush1.bf16.msra.mxu0 %v939
    %948 = vmatprep.subr.bf16.mxu0 0
    %949 = vmatpush1.bf16.msra.mxu0 %v940
    %950 = vmatprep.subr.bf16.mxu0 0
    %951 = vmatpush1.bf16.msra.mxu0 0
    %952 = vmatprep.subr.bf16.mxu0 0
    %953 = vmatpush1.bf16.msra.mxu0 0
    %954 = vmatprep.subr.bf16.mxu0 0
    %955 = vmatpush1.bf16.msra.mxu0 0
    %956 = vmatprep.subr.bf16.mxu0 0
    %957 = vmatpush1.bf16.msra.mxu0 0
    %958 = vmatprep.subr.bf16.mxu0 0
    %959 = vmatpush1.bf16.msra.mxu0 0
    %960 = vmatprep.subr.bf16.mxu0 0
    %961 = vmatpush1.bf16.msra.mxu0 0
    %962 = vmatprep.subr.bf16.mxu0 0
    %963 = vmatpush1.bf16.msra.mxu0 0
    %964 = vmatprep.subr.bf16.mxu0 0
    %965 = vmatpush1.bf16.msra.mxu0 0
    %966 = vmatprep.subr.bf16.mxu0 0
    %967 = vmatpush1.bf16.msra.mxu0 0
    %968 = vmatprep.subr.bf16.mxu0 0
    %969 = vmatpush1.bf16.msra.mxu0 0
    %970 = vmatprep.subr.bf16.mxu0 0
    %971 = vmatpush1.bf16.msra.mxu0 0
    %972 = vmatprep.subr.bf16.mxu0 0
    %973 = vmatpush1.bf16.msra.mxu0 0
    %974 = vmatprep.subr.bf16.mxu0 0
    %975 = vmatpush1.bf16.msra.mxu0 0
    %976 = vmatprep.subr.bf16.mxu0 0
    %977 = vmatpush1.bf16.msra.mxu0 0
    %978 = vmatprep.mubr.bf16.mxu0 0
    %979 = vmatmul.mubr.bf16.gmra.mrb[0].mxu0 %v944
    %v980 = vpop.f32.mrb[0].mxu0
    %v981 = vadd.f32 %v929, %v980
    %v982 = vpop.f32.mrb[0].mxu0
    %v983 = vpop.f32.mrb[0].mxu0
    %v984 = vadd.f32 %v929, %v983
    %v985 = vpop.f32.mrb[0].mxu0
    %986 = vdwg.mxu0
    %v987 = vmax.f32 %v981, 0.0
    %v988 = vmax.f32 %v984, 0.0
    %v989 = vpack.c.bf16 %v988, %v987
    %v990 = vld [vmem:[#allocation19] sm:$0xf]
    %v991 = vld [vmem:[#allocation19 + $0x4] sm:$0xf]
    %v992 = vld [vmem:[#allocation19 + $0x8] sm:$0xf]
    %v993 = vld [vmem:[#allocation19 + $0xc] sm:$0xf]
    %v994 = vld [vmem:[#allocation19 + $0x10] sm:$0xf]
    %v995 = vld [vmem:[#allocation19 + $0x14] sm:$0xf]
    %v996 = vld [vmem:[#allocation19 + $0x18] sm:$0xf]
    %v997 = vld [vmem:[#allocation19 + $0x1c] sm:$0xf]
    %v998 = vld [vmem:[#allocation20] sm:$0x1]
    %v1000 = vlaneseq
    %v1001 = vshrl.u32 %v1000, 7
    %v1002 = vsub.s32 0, %v1001
    %v1003 = vrot.slane %v998, %v1002
    %v1013 = vunpack.c.l.b16 %v990
    %v1014 = vunpack.c.l.b16 %v991
    %v1015 = vunpack.c.l.b16 %v992
    %v1016 = vunpack.c.l.b16 %v993
    %v1017 = vunpack.c.l.b16 %v994
    %v1018 = vunpack.c.l.b16 %v995
    %v1019 = vunpack.c.l.b16 %v996
    %v1020 = vunpack.c.l.b16 %v997
    %v1021 = vpack.c.b16 %v1014, %v1013
    %v1022 = vpack.c.b16 %v1016, %v1015
    %v1023 = vpack.c.b16 %v1018, %v1017
    %v1024 = vpack.c.b16 %v1020, %v1019
    %vm1029 = vcmask 523264
    %v1031 = vsel %vm1029, %v989, 0
    %1033 = vmatprep.subr.bf16.mxu0 0
    %1034 = vmatpush1.bf16.msra.mxu0 %v1021
    %1035 = vmatprep.subr.bf16.mxu0 0
    %1036 = vmatpush1.bf16.msra.mxu0 %v1022
    %1037 = vmatprep.subr.bf16.mxu0 0
    %1038 = vmatpush1.bf16.msra.mxu0 %v1023
    %1039 = vmatprep.subr.bf16.mxu0 0
    %1040 = vmatpush1.bf16.msra.mxu0 %v1024
    %1041 = vmatprep.subr.bf16.mxu0 0
    %1042 = vmatpush1.bf16.msra.mxu0 0
    %1043 = vmatprep.subr.bf16.mxu0 0
    %1044 = vmatpush1.bf16.msra.mxu0 0
    %1045 = vmatprep.subr.bf16.mxu0 0
    %1046 = vmatpush1.bf16.msra.mxu0 0
    %1047 = vmatprep.subr.bf16.mxu0 0
    %1048 = vmatpush1.bf16.msra.mxu0 0
    %1049 = vmatprep.subr.bf16.mxu0 0
    %1050 = vmatpush1.bf16.msra.mxu0 0
    %1051 = vmatprep.subr.bf16.mxu0 0
    %1052 = vmatpush1.bf16.msra.mxu0 0
    %1053 = vmatprep.subr.bf16.mxu0 0
    %1054 = vmatpush1.bf16.msra.mxu0 0
    %1055 = vmatprep.subr.bf16.mxu0 0
    %1056 = vmatpush1.bf16.msra.mxu0 0
    %1057 = vmatprep.subr.bf16.mxu0 0
    %1058 = vmatpush1.bf16.msra.mxu0 0
    %1059 = vmatprep.subr.bf16.mxu0 0
    %1060 = vmatpush1.bf16.msra.mxu0 0
    %1061 = vmatprep.subr.bf16.mxu0 0
    %1062 = vmatpush1.bf16.msra.mxu0 0
    %1063 = vmatprep.subr.bf16.mxu0 0
    %1064 = vmatpush1.bf16.msra.mxu0 0
    %1065 = vmatprep.mubr.bf16.mxu0 0
    %1066 = vmatmul.mubr.bf16.gmra.mrb[0].mxu0 %v1031
    %v1067 = vpop.f32.mrb[0].mxu0
    %v1068 = vadd.f32 %v1003, %v1067
    %v1069 = vpop.f32.mrb[0].mxu0
    %v1070 = vpop.f32.mrb[0].mxu0
    %v1071 = vadd.f32 %v1003, %v1070
    %v1072 = vpop.f32.mrb[0].mxu0
    %1073 = vdwg.mxu0
    %v1074 = vadd.f32 %v917, %v1068
    %v1075 = vadd.f32 %v918, %v1071
    %v1076 = vld [vmem:[#allocation22] sm:$0x1]
    %v1077 = vld [vmem:[#allocation23] sm:$0x1]
    %v1078 = vsel %vm249, %v1074, 0.0
    %1079 = vadd.xlane.f32.xlu0 %v1078
    %v1080 = vpop.xlane.xlu0 %1079
    %v1081 = vsel %vm249, %v1075, 0.0
    %1082 = vadd.xlane.f32.xlu0 %v1081
    %v1083 = vpop.xlane.xlu0 %1082
    %v1084 = vmul.f32 %v1080, %v882
    %v1085 = vmul.f32 %v1083, %v882
    %v1086 = vsub.f32 %v1074, %v1084
    %v1087 = vsub.f32 %v1075, %v1085
    %v1088 = vmul.f32 %v1086, %v1086
    %v1089 = vmul.f32 %v1087, %v1087
    %v1090 = vsel %vm249, %v1088, 0.0
    %1091 = vadd.xlane.f32.xlu0 %v1090
    %v1092 = vpop.xlane.xlu0 %1091
    %v1093 = vsel %vm249, %v1089, 0.0
    %1094 = vadd.xlane.f32.xlu0 %v1093
    %v1095 = vpop.xlane.xlu0 %1094
    %v1096 = vmul.f32 %v1092, %v882
    %v1097 = vmul.f32 %v1095, %v882
    %v1098 = vadd.f32 %v1096, 1e-05
    %v1099 = vadd.f32 %v1097, 1e-05
    %v1100 = vrsqrt.pop %v1098
    %v1101 = vrsqrt.pop %v1099
    %v1102 = vmul.f32 %v1086, %v1100
    %v1103 = vmul.f32 %v1087, %v1101
    %v1105 = vlaneseq
    %v1106 = vshrl.u32 %v1105, 7
    %v1107 = vsub.s32 0, %v1106
    %v1108 = vrot.slane %v1076, %v1107
    %v1110 = vmul.f32 %v1102, %v1108
    %v1111 = vmul.f32 %v1103, %v1108
    %v1113 = vlaneseq
    %v1114 = vshrl.u32 %v1113, 7
    %v1115 = vsub.s32 0, %v1114
    %v1116 = vrot.slane %v1077, %v1115
    %v1118 = vadd.f32 %v1110, %v1116
    %v1119 = vadd.f32 %v1111, %v1116
    %1120 = vst.msk [vmem:[#allocation25] sm:$0xff] %vm249, %v1118
    %1121 = vst.msk [vmem:[#allocation25 + $0x8] sm:$0xff] %vm249, %v1119
    // Predicated region
    $region114: #{tpu_custom_call.1} parent=1 // pred_check
      _
    $region115: #{tpu_custom_call.1} parent=1 // pred_check_branch
      %1123 = sbr.rel (0) target = $region117
    $region116: #{tpu_custom_call.1} parent=1 // pred_region
      %s1125 = ssub.s32 256, 256
      %1126 = vsyncadd [#allocation4], %s1125
      %s1127 = sshll.u32 [#allocation25], 4
      %s1128 = int_to_ptr.vmem [resolvable:$true] %s1127
      %1133 = dma.vmem_to_hbm [thread:$0]  %s1128, 256, %s14, [#allocation4], 128, 128, 8
    $region117: #{tpu_custom_call.1} parent=1 // pred_fallthru
      _
    // Predicated region
    $region118: #{tpu_custom_call.1} parent=1 // pred_check
      _
    $region119: #{tpu_custom_call.1} parent=1 // pred_check_branch
      %1135 = sbr.rel (0) target = $region121
    $region120: #{tpu_custom_call.1} parent=1 // pred_region
      %1136 = dma.done [#allocation4], 256
    $region121: #{tpu_custom_call.1} parent=1 // pred_fallthru
      _
    %1137 = vsyncpa [#allocation3], 1
    %1138 = vsyncpa [#allocation6], 1
    %1139 = vsyncpa [#allocation9], 1
    %1140 = vsyncpa [#allocation12], 1
    %1141 = vsyncpa [#allocation15], 1
    %1142 = vsyncpa [#allocation18], 1
    %1143 = vsyncpa [#allocation21], 1
    %1144 = vsyncpa [#allocation24], 1
    %1145 = vsyncpa [#allocation4], 1

</llo_original>
